<compile_context>
chip_gen: v5e
topology: v5e:2x2
jax: 0.10.0
libtpu: 0.0.40
codegen_flags: <defaults>
</compile_context>

<pallas_src>
import functools
import math

import jax
import jax.numpy as jnp
from jax.experimental import pallas as pl
from jax.experimental.pallas import tpu as pltpu

LN_EPS = 1e-5  # PyTorch layer_norm_eps default


def _layer_norm(x):
    # gamma=1, beta=0 at PyTorch init -> affine folded out (identity).
    mu = jnp.mean(x, axis=-1, keepdims=True)
    xc = x - mu
    var = jnp.mean(xc * xc, axis=-1, keepdims=True)
    return xc * jax.lax.rsqrt(var + LN_EPS)


# ----------------------------------------------------------------------------
# Fused Pallas kernel: all encoder layers + decoder, one batch row per grid step
# ----------------------------------------------------------------------------
def fused_forward_kernel(x_ref, bias_ref, wslab_ref, bslab_ref, decw_ref, decb_ref,
                         out_ref, *, n_heads, ff_dim, n_layers):
    """One batch element of the whole forward pass (post-norm encoder + decoder).

    x_ref:     (1, S, E)  f32  activations for this batch element
    bias_ref:  (1, S, S)  f32  additive attention bias (attn_mask + key padding)
    wslab_ref: (L, RW, CW) bf16 packed per-layer weights:
                 rows [0:E)  cols [0   : 3E )  -> wqkv  (Wq pre-scaled by 1/sqrt(Dh))
                 rows [0:E)  cols [3E  : 4E )  -> wo    (concat-head in-rows)
                 rows [0:E)  cols [4E  : 4E+F) -> w1
                 rows [0:F)  cols [4E+F: 4E+F+E) -> w2
    bslab_ref: (L, 1, F+E) f32  [b1 | b2]
    decw_ref:  (E, Vp=128) bf16   decb_ref: (1, Vp) f32
    out_ref:   (1, S, Vp)  f32  lane-dense logits slab
    """
    _, S, E = x_ref.shape
    H, F, L = n_heads, ff_dim, n_layers
    Dh = E // H
    bf16 = jnp.bfloat16
    f32 = jnp.float32

    x = x_ref[0]          # (S, E) f32
    bias = bias_ref[0]    # (S, S) f32

    for l in range(L):
        wqkv = wslab_ref[l, :E, 0:3 * E]                      # (E, 3E) bf16
        w1 = wslab_ref[l, :E, 4 * E:4 * E + F]                # (E, F)
        w2 = wslab_ref[l, :F, 4 * E + F:4 * E + F + E]        # (F, E)
        b1 = bslab_ref[l, :, 0:F]                             # (1, F) f32
        b2 = bslab_ref[l, :, F:F + E]                         # (1, E) f32

        # packed QKV projection (in_proj bias is zero at PyTorch init -> omitted)
        qkv = jnp.dot(x.astype(bf16), wqkv, preferred_element_type=f32)   # (S, 3E)

        # multi-head attention with per-head output-projection accumulation
        attn = jnp.zeros((S, E), f32)
        for h in range(H):
            q = qkv[:, h * Dh:(h + 1) * Dh].astype(bf16)              # scale folded in
            k = qkv[:, E + h * Dh:E + (h + 1) * Dh].astype(bf16)
            v = qkv[:, 2 * E + h * Dh:2 * E + (h + 1) * Dh].astype(bf16)

            s = jax.lax.dot_general(q, k, (((1,), (1,)), ((), ())),
                                    preferred_element_type=f32) + bias   # (S, S)
            s = s - jnp.max(s, axis=-1, keepdims=True)
            p = jnp.exp(s)
            p = p * pl.reciprocal(jnp.sum(p, axis=-1, keepdims=True), approx=True)
            ctx = jnp.dot(p.astype(bf16), v, preferred_element_type=f32)  # (S, Dh)

            wo_h = wslab_ref[l, h * Dh:(h + 1) * Dh, 3 * E:4 * E]        # (Dh, E)
            attn = attn + jnp.dot(ctx.astype(bf16), wo_h,
                                  preferred_element_type=f32)
        # out_proj bias is zero at PyTorch init -> omitted

        # residual + LayerNorm 1 (f32)
        h1 = _layer_norm(x + attn)

        # feed-forward (relu), bf16 matmuls, f32 element-wise
        f = jnp.dot(h1.astype(bf16), w1, preferred_element_type=f32) + b1
        f = jnp.maximum(f, 0.0)
        f = jnp.dot(f.astype(bf16), w2, preferred_element_type=f32) + b2

        # residual + LayerNorm 2
        x = _layer_norm(h1 + f)

    # decoder: lane-dense 128-wide output slab
    out = jnp.dot(x.astype(bf16), decw_ref[...],
                  preferred_element_type=f32) + decb_ref[...]
    out_ref[0] = out


def fused_forward(x, bias, params):
    B, S, E = x.shape
    L, RW, CW = params["wslab"].shape
    F = params["ff_dim"]
    Vp = params["decw"].shape[1]
    kernel = functools.partial(fused_forward_kernel,
                               n_heads=params["n_heads"], ff_dim=F, n_layers=L)
    return pl.pallas_call(
        kernel,
        out_shape=jax.ShapeDtypeStruct((B, S, Vp), jnp.float32),
        grid=(B,),
        in_specs=[
            pl.BlockSpec((1, S, E), lambda b: (b, 0, 0)),      # x: per-batch block
            pl.BlockSpec((1, S, S), lambda b: (b, 0, 0)),      # bias: per-batch block
            pl.BlockSpec((L, RW, CW), lambda b: (0, 0, 0)),    # weight slab (resident)
            pl.BlockSpec((L, 1, F + E), lambda b: (0, 0, 0)),  # bias slab
            pl.BlockSpec((E, Vp), lambda b: (0, 0)),           # decoder weight
            pl.BlockSpec((1, Vp), lambda b: (0, 0)),           # decoder bias
        ],
        out_specs=pl.BlockSpec((1, S, Vp), lambda b: (b, 0, 0)),
        compiler_params=pltpu.CompilerParams(dimension_semantics=("parallel",)),
    )(x, bias, params["wslab"], params["bslab"], params["decw"], params["decb"])


# ----------------------------------------------------------------------------
# Parameters (deterministic, synthetic; matches PyTorch init structure)
# ----------------------------------------------------------------------------
def _sinusoidal_pe(seq_len, emb_dim):
    pos = jnp.arange(seq_len, dtype=jnp.float32)[:, None]
    div = jnp.exp(jnp.arange(0, emb_dim, 2, dtype=jnp.float32) *
                  (-math.log(10000.0) / emb_dim))
    pe = jnp.zeros((seq_len, emb_dim), jnp.float32)
    pe = pe.at[:, 0::2].set(jnp.sin(pos * div))
    pe = pe.at[:, 1::2].set(jnp.cos(pos * div))
    return pe


def init_params(key, *, num_tokens, emb_dim, n_heads, ff_dim, n_layers, seq_len):
    E, F, H, L = emb_dim, ff_dim, n_heads, n_layers
    Dh = E // H
    attn_scale = 1.0 / math.sqrt(Dh)
    ks = jax.random.split(key, 3 + L)
    params = {"num_tokens": num_tokens, "n_heads": H, "ff_dim": F}

    # nn.Embedding, then nn.init.normal_ overwrites everything (incl. padding row).
    params["emb"] = jax.random.normal(ks[0], (num_tokens, E), jnp.float32)
    params["pe"] = _sinusoidal_pe(seq_len, E)
    params["emb_scale"] = float(math.sqrt(E))

    # Packed per-layer weight slab (bf16) and FFN-bias slab (f32).
    # MHA in_proj/out_proj biases and LN affine are identity at PyTorch init and
    # are intentionally not materialized (re-add for trained checkpoints).
    RW = max(E, F)
    CW = 4 * E + F + E
    wslab = jnp.zeros((L, RW, CW), jnp.float32)
    bslab = jnp.zeros((L, 1, F + E), jnp.float32)
    std_e = 1.0 / math.sqrt(E)
    std_f = 1.0 / math.sqrt(F)
    for i in range(L):
        lk = jax.random.split(ks[3 + i], 8)
        wq = jax.random.normal(lk[0], (E, E), jnp.float32) * std_e
        wk = jax.random.normal(lk[1], (E, E), jnp.float32) * std_e
        wv = jax.random.normal(lk[2], (E, E), jnp.float32) * std_e
        wo = jax.random.normal(lk[3], (E, E), jnp.float32) * std_e
        w1 = jax.random.normal(lk[4], (E, F), jnp.float32) * std_e
        w2 = jax.random.normal(lk[5], (F, E), jnp.float32) * std_f
        b1 = jax.random.uniform(lk[6], (F,), jnp.float32, -std_e, std_e)
        b2 = jax.random.uniform(lk[7], (E,), jnp.float32, -std_f, std_f)

        wslab = wslab.at[i, :E, 0:3 * E].set(
            jnp.concatenate([wq * attn_scale, wk, wv], axis=1))   # scale folded into Wq
        wslab = wslab.at[i, :E, 3 * E:4 * E].set(wo)
        wslab = wslab.at[i, :E, 4 * E:4 * E + F].set(w1)
        wslab = wslab.at[i, :F, 4 * E + F:4 * E + F + E].set(w2)
        bslab = bslab.at[i, 0, 0:F].set(b1)
        bslab = bslab.at[i, 0, F:F + E].set(b2)
    params["wslab"] = wslab.astype(jnp.bfloat16)
    params["bslab"] = bslab

    # decoder nn.Linear(emb_dim, num_tokens); weight re-init N(0,1) in _init_weights.
    dec_w = jax.random.normal(ks[1], (num_tokens, E), jnp.float32).T   # (E, V)
    bound = 1.0 / math.sqrt(E)
    dec_b = jax.random.uniform(ks[2], (1, num_tokens), jnp.float32, -bound, bound)
    v_pad = max(128, ((num_tokens + 127) // 128) * 128)   # lane-dense output width
    params["decw"] = (jnp.zeros((E, v_pad), jnp.float32)
                      .at[:, :num_tokens].set(dec_w).astype(jnp.bfloat16))
    params["decb"] = jnp.zeros((1, v_pad), jnp.float32).at[:, :num_tokens].set(dec_b)
    return params


# ----------------------------------------------------------------------------
# Forward pass (glue in plain JAX, everything heavy in the one fused kernel)
# ----------------------------------------------------------------------------
def transformer_encoder_forward(params, src, num_masks, src_key_padding_mask, mask_key):
    """src: (seq_len, batch) int32 token ids; kpm: (batch, seq_len) bool (True=pad)."""
    S, B = src.shape
    V = params["num_tokens"]

    # TODO(synk): random.sample -> deterministic jax.random.choice (no torch RNG parity)
    masked_idx = jax.random.choice(mask_key, S, shape=(num_masks,), replace=False)
    mask_row = jnp.zeros((S,), jnp.float32).at[masked_idx].set(-jnp.inf)
    masked_bool = jnp.isneginf(mask_row)                     # _mask[0].bool()

    # _tmp[_mask[0].bool()] = 0 : zero-out (token id 0) the masked seq positions
    tmp = jnp.where(masked_bool[:, None], 0, src)
    emb = params["emb"][tmp]                                 # (S, B, E)

    # positional encoding (eval: dropout = identity)
    x = emb * params["emb_scale"] + params["pe"][:, None, :]
    x = jnp.transpose(x, (1, 0, 2)).astype(jnp.float32)      # (B, S, E) batch-major

    # additive attention bias: attn_mask (same -inf columns every row) combined
    # with key_padding_mask (-inf over padded keys, per batch)
    attn_mask = jnp.tile(mask_row, (S, 1))                   # (S, S)
    kpm_bias = jnp.where(src_key_padding_mask, -jnp.inf, 0.0).astype(jnp.float32)
    bias = attn_mask[None, :, :] + kpm_bias[:, None, :]      # (B, S, S)

    out = fused_forward(x, bias, params)                     # (B, S, Vpad)
    logits = out[:, :, :V]                                   # strip lane padding
    return jnp.transpose(logits, (1, 0, 2)), mask_row        # PyTorch layout (S, B, V)


# ----------------------------------------------------------------------------
if __name__ == "__main__":
    NUM_TOKENS, PAD_IDX = 50, 0
    SEQ_LEN, BATCH, EMB = 8, 2, 32
    N_HEADS, FF_DIM, N_LAYERS = 2, 64, 2
    NUM_MASKS = 2

    key = jax.random.PRNGKey(0)
    k_param, k_src, k_mask = jax.random.split(key, 3)

    params = init_params(k_param, num_tokens=NUM_TOKENS, emb_dim=EMB,
                         n_heads=N_HEADS, ff_dim=FF_DIM, n_layers=N_LAYERS,
                         seq_len=SEQ_LEN)

    src = jax.random.randint(k_src, (SEQ_LEN, BATCH), 1, NUM_TOKENS, jnp.int32)
    src_key_padding_mask = (jnp.zeros((BATCH, SEQ_LEN), jnp.bool_)
                            .at[1, SEQ_LEN - 1].set(True))

    logits, mask_row = transformer_encoder_forward(
        params, src, NUM_MASKS, src_key_padding_mask, k_mask)
    logits = jax.block_until_ready(logits)
    mask_row = jax.block_until_ready(mask_row)

    assert logits.shape == (SEQ_LEN, BATCH, NUM_TOKENS)
    assert mask_row.shape == (SEQ_LEN,)
    assert bool(jnp.all(jnp.isfinite(logits)))
    print("KERNEL_OK")
</pallas_src>

<mosaic_0001>
module attributes {stable_mosaic.version = 11 : i64} {
  func.func @fused_forward_kernel(%arg0: i32, %arg1: memref<1x8x32xf32, #tpu.memory_space<vmem>>, %arg2: memref<1x8x8xf32, #tpu.memory_space<vmem>>, %arg3: memref<2x64x224xbf16, #tpu.memory_space<vmem>>, %arg4: memref<2x1x96xf32, #tpu.memory_space<vmem>>, %arg5: memref<32x128xbf16, #tpu.memory_space<vmem>>, %arg6: memref<1x128xf32, #tpu.memory_space<vmem>>, %arg7: memref<1x8x128xf32, #tpu.memory_space<vmem>>) attributes {dimension_semantics = [#tpu.dimension_semantics<parallel>], iteration_bounds = array<i64: 2>, scalar_prefetch = 0 : i64, scratch_operands = 0 : i64, tpu.core_type = #tpu.core_type<tc>, window_params = [{transform_indices = @transform_0, window_bounds = array<i64: 1, 8, 32>}, {transform_indices = @transform_1, window_bounds = array<i64: 1, 8, 8>}, {pipeline_mode = #tpu.pipeline_mode<synchronous>, transform_indices = @transform_2, window_bounds = array<i64: 2, 64, 224>}, {pipeline_mode = #tpu.pipeline_mode<synchronous>, transform_indices = @transform_3, window_bounds = array<i64: 2, 1, 96>}, {pipeline_mode = #tpu.pipeline_mode<synchronous>, transform_indices = @transform_4, window_bounds = array<i64: 32, 128>}, {pipeline_mode = #tpu.pipeline_mode<synchronous>, transform_indices = @transform_5, window_bounds = array<i64: 1, 128>}, {transform_indices = @transform_6, window_bounds = array<i64: 1, 8, 128>}]} {
    %c0 = arith.constant 0 : index
    %c0_0 = arith.constant 0 : index
    %c0_1 = arith.constant 0 : index
    %0 = vector.load %arg1[%c0, %c0_0, %c0_1] : memref<1x8x32xf32, #tpu.memory_space<vmem>>, vector<1x8x32xf32>
    %1 = vector.shape_cast %0 : vector<1x8x32xf32> to vector<8x32xf32>
    %c0_2 = arith.constant 0 : index
    %c0_3 = arith.constant 0 : index
    %c0_4 = arith.constant 0 : index
    %2 = vector.load %arg2[%c0_2, %c0_3, %c0_4] : memref<1x8x8xf32, #tpu.memory_space<vmem>>, vector<1x8x8xf32>
    %3 = vector.shape_cast %2 : vector<1x8x8xf32> to vector<8x8xf32>
    %c0_5 = arith.constant 0 : index
    %c0_6 = arith.constant 0 : index
    %c0_7 = arith.constant 0 : index
    %4 = vector.load %arg3[%c0_5, %c0_6, %c0_7] : memref<2x64x224xbf16, #tpu.memory_space<vmem>>, vector<1x32x96xbf16>
    %5 = vector.shape_cast %4 : vector<1x32x96xbf16> to vector<32x96xbf16>
    %c0_8 = arith.constant 0 : index
    %c0_9 = arith.constant 0 : index
    %c128 = arith.constant 128 : index
    %6 = vector.load %arg3[%c0_8, %c0_9, %c128] : memref<2x64x224xbf16, #tpu.memory_space<vmem>>, vector<1x32x64xbf16>
    %7 = vector.shape_cast %6 : vector<1x32x64xbf16> to vector<32x64xbf16>
    %c0_10 = arith.constant 0 : index
    %c0_11 = arith.constant 0 : index
    %c192 = arith.constant 192 : index
    %8 = vector.load %arg3[%c0_10, %c0_11, %c192] : memref<2x64x224xbf16, #tpu.memory_space<vmem>>, vector<1x64x32xbf16>
    %9 = vector.shape_cast %8 : vector<1x64x32xbf16> to vector<64x32xbf16>
    %c0_12 = arith.constant 0 : index
    %c0_13 = arith.constant 0 : index
    %c0_14 = arith.constant 0 : index
    %10 = vector.load %arg4[%c0_12, %c0_13, %c0_14] : memref<2x1x96xf32, #tpu.memory_space<vmem>>, vector<1x1x64xf32>
    %11 = vector.shape_cast %10 : vector<1x1x64xf32> to vector<1x64xf32>
    %c0_15 = arith.constant 0 : index
    %c0_16 = arith.constant 0 : index
    %c64 = arith.constant 64 : index
    %12 = vector.load %arg4[%c0_15, %c0_16, %c64] : memref<2x1x96xf32, #tpu.memory_space<vmem>>, vector<1x1x32xf32>
    %13 = vector.shape_cast %12 : vector<1x1x32xf32> to vector<1x32xf32>
    %14 = arith.truncf %1 : vector<8x32xf32> to vector<8x32xbf16>
    %cst = arith.constant dense<0.000000e+00> : vector<8x96xf32>
    %15 = tpu.matmul %14, %5, %cst {dimension_numbers = #tpu.dot_dimension_numbers<[1], [0], [0], [1], [0, 0, 1, 1], [], []>} : vector<8x32xbf16>, vector<32x96xbf16>, vector<8x96xf32> -> vector<8x96xf32>
    %cst_17 = arith.constant 0.000000e+00 : f32
    %16 = vector.broadcast %cst_17 : f32 to vector<8x32xf32>
    %17 = vector.extract_strided_slice %15 {offsets = [0, 0], sizes = [8, 16], strides = [1, 1]} : vector<8x96xf32> to vector<8x16xf32>
    %18 = arith.truncf %17 : vector<8x16xf32> to vector<8x16xbf16>
    %19 = vector.extract_strided_slice %15 {offsets = [0, 32], sizes = [8, 16], strides = [1, 1]} : vector<8x96xf32> to vector<8x16xf32>
    %20 = arith.truncf %19 : vector<8x16xf32> to vector<8x16xbf16>
    %21 = vector.extract_strided_slice %15 {offsets = [0, 64], sizes = [8, 16], strides = [1, 1]} : vector<8x96xf32> to vector<8x16xf32>
    %22 = arith.truncf %21 : vector<8x16xf32> to vector<8x16xbf16>
    %cst_18 = arith.constant dense<0.000000e+00> : vector<8x8xf32>
    %23 = tpu.matmul %18, %20, %cst_18 {dimension_numbers = #tpu.dot_dimension_numbers<[1], [1], [0], [0], [0, 0, 1, 0], [], []>} : vector<8x16xbf16>, vector<8x16xbf16>, vector<8x8xf32> -> vector<8x8xf32>
    %24 = arith.addf %23, %3 : vector<8x8xf32>
    %cst_19 = arith.constant dense<0xFF800000> : vector<8xf32>
    %25 = vector.multi_reduction <maximumf>, %24, %cst_19 [1] : vector<8x8xf32> to vector<8xf32>
    %26 = vector.shape_cast %25 : vector<8xf32> to vector<8x1xf32>
    %27 = vector.broadcast %26 : vector<8x1xf32> to vector<8x8xf32>
    %28 = arith.subf %24, %27 : vector<8x8xf32>
    %29 = math.exp %28 : vector<8x8xf32>
    %cst_20 = arith.constant dense<0.000000e+00> : vector<8xf32>
    %30 = vector.multi_reduction <add>, %29, %cst_20 [1] : vector<8x8xf32> to vector<8xf32>
    %31 = vector.shape_cast %30 : vector<8xf32> to vector<8x1xf32>
    %32 = tpu.reciprocal %31 {approx = true} : vector<8x1xf32> -> vector<8x1xf32>
    %33 = vector.broadcast %32 : vector<8x1xf32> to vector<8x8xf32>
    %34 = arith.mulf %29, %33 : vector<8x8xf32>
    %35 = arith.truncf %34 : vector<8x8xf32> to vector<8x8xbf16>
    %cst_21 = arith.constant dense<0.000000e+00> : vector<8x16xf32>
    %36 = tpu.matmul %35, %22, %cst_21 {dimension_numbers = #tpu.dot_dimension_numbers<[1], [0], [0], [1], [0, 0, 1, 1], [], []>} : vector<8x8xbf16>, vector<8x16xbf16>, vector<8x16xf32> -> vector<8x16xf32>
    %c0_22 = arith.constant 0 : index
    %c0_23 = arith.constant 0 : index
    %c96 = arith.constant 96 : index
    %37 = vector.load %arg3[%c0_22, %c0_23, %c96] : memref<2x64x224xbf16, #tpu.memory_space<vmem>>, vector<1x16x32xbf16>
    %38 = vector.shape_cast %37 : vector<1x16x32xbf16> to vector<16x32xbf16>
    %39 = arith.truncf %36 : vector<8x16xf32> to vector<8x16xbf16>
    %cst_24 = arith.constant dense<0.000000e+00> : vector<8x32xf32>
    %40 = tpu.matmul %39, %38, %cst_24 {dimension_numbers = #tpu.dot_dimension_numbers<[1], [0], [0], [1], [0, 0, 1, 1], [], []>} : vector<8x16xbf16>, vector<16x32xbf16>, vector<8x32xf32> -> vector<8x32xf32>
    %41 = arith.addf %16, %40 : vector<8x32xf32>
    %42 = vector.extract_strided_slice %15 {offsets = [0, 16], sizes = [8, 16], strides = [1, 1]} : vector<8x96xf32> to vector<8x16xf32>
    %43 = arith.truncf %42 : vector<8x16xf32> to vector<8x16xbf16>
    %44 = vector.extract_strided_slice %15 {offsets = [0, 48], sizes = [8, 16], strides = [1, 1]} : vector<8x96xf32> to vector<8x16xf32>
    %45 = arith.truncf %44 : vector<8x16xf32> to vector<8x16xbf16>
    %46 = vector.extract_strided_slice %15 {offsets = [0, 80], sizes = [8, 16], strides = [1, 1]} : vector<8x96xf32> to vector<8x16xf32>
    %47 = arith.truncf %46 : vector<8x16xf32> to vector<8x16xbf16>
    %cst_25 = arith.constant dense<0.000000e+00> : vector<8x8xf32>
    %48 = tpu.matmul %43, %45, %cst_25 {dimension_numbers = #tpu.dot_dimension_numbers<[1], [1], [0], [0], [0, 0, 1, 0], [], []>} : vector<8x16xbf16>, vector<8x16xbf16>, vector<8x8xf32> -> vector<8x8xf32>
    %49 = arith.addf %48, %3 : vector<8x8xf32>
    %cst_26 = arith.constant dense<0xFF800000> : vector<8xf32>
    %50 = vector.multi_reduction <maximumf>, %49, %cst_26 [1] : vector<8x8xf32> to vector<8xf32>
    %51 = vector.shape_cast %50 : vector<8xf32> to vector<8x1xf32>
    %52 = vector.broadcast %51 : vector<8x1xf32> to vector<8x8xf32>
    %53 = arith.subf %49, %52 : vector<8x8xf32>
    %54 = math.exp %53 : vector<8x8xf32>
    %cst_27 = arith.constant dense<0.000000e+00> : vector<8xf32>
    %55 = vector.multi_reduction <add>, %54, %cst_27 [1] : vector<8x8xf32> to vector<8xf32>
    %56 = vector.shape_cast %55 : vector<8xf32> to vector<8x1xf32>
    %57 = tpu.reciprocal %56 {approx = true} : vector<8x1xf32> -> vector<8x1xf32>
    %58 = vector.broadcast %57 : vector<8x1xf32> to vector<8x8xf32>
    %59 = arith.mulf %54, %58 : vector<8x8xf32>
    %60 = arith.truncf %59 : vector<8x8xf32> to vector<8x8xbf16>
    %cst_28 = arith.constant dense<0.000000e+00> : vector<8x16xf32>
    %61 = tpu.matmul %60, %47, %cst_28 {dimension_numbers = #tpu.dot_dimension_numbers<[1], [0], [0], [1], [0, 0, 1, 1], [], []>} : vector<8x8xbf16>, vector<8x16xbf16>, vector<8x16xf32> -> vector<8x16xf32>
    %c0_29 = arith.constant 0 : index
    %c16 = arith.constant 16 : index
    %c96_30 = arith.constant 96 : index
    %62 = vector.load %arg3[%c0_29, %c16, %c96_30] : memref<2x64x224xbf16, #tpu.memory_space<vmem>>, vector<1x16x32xbf16>
    %63 = vector.shape_cast %62 : vector<1x16x32xbf16> to vector<16x32xbf16>
    %64 = arith.truncf %61 : vector<8x16xf32> to vector<8x16xbf16>
    %cst_31 = arith.constant dense<0.000000e+00> : vector<8x32xf32>
    %65 = tpu.matmul %64, %63, %cst_31 {dimension_numbers = #tpu.dot_dimension_numbers<[1], [0], [0], [1], [0, 0, 1, 1], [], []>} : vector<8x16xbf16>, vector<16x32xbf16>, vector<8x32xf32> -> vector<8x32xf32>
    %66 = arith.addf %41, %65 : vector<8x32xf32>
    %67 = arith.addf %1, %66 : vector<8x32xf32>
    %cst_32 = arith.constant dense<0.000000e+00> : vector<8xf32>
    %68 = vector.multi_reduction <add>, %67, %cst_32 [1] : vector<8x32xf32> to vector<8xf32>
    %69 = vector.shape_cast %68 : vector<8xf32> to vector<8x1xf32>
    %cst_33 = arith.constant 3.200000e+01 : f32
    %70 = vector.broadcast %cst_33 : f32 to vector<8x1xf32>
    %71 = arith.divf %69, %70 : vector<8x1xf32>
    %72 = vector.broadcast %71 : vector<8x1xf32> to vector<8x32xf32>
    %73 = arith.subf %67, %72 : vector<8x32xf32>
    %74 = arith.mulf %73, %73 : vector<8x32xf32>
    %cst_34 = arith.constant dense<0.000000e+00> : vector<8xf32>
    %75 = vector.multi_reduction <add>, %74, %cst_34 [1] : vector<8x32xf32> to vector<8xf32>
    %76 = vector.shape_cast %75 : vector<8xf32> to vector<8x1xf32>
    %cst_35 = arith.constant 3.200000e+01 : f32
    %77 = vector.broadcast %cst_35 : f32 to vector<8x1xf32>
    %78 = arith.divf %76, %77 : vector<8x1xf32>
    %cst_36 = arith.constant 9.99999974E-6 : f32
    %79 = vector.broadcast %cst_36 : f32 to vector<8x1xf32>
    %80 = arith.addf %78, %79 : vector<8x1xf32>
    %81 = math.rsqrt %80 : vector<8x1xf32>
    %82 = vector.broadcast %81 : vector<8x1xf32> to vector<8x32xf32>
    %83 = arith.mulf %73, %82 : vector<8x32xf32>
    %84 = arith.truncf %83 : vector<8x32xf32> to vector<8x32xbf16>
    %cst_37 = arith.constant dense<0.000000e+00> : vector<8x64xf32>
    %85 = tpu.matmul %84, %7, %cst_37 {dimension_numbers = #tpu.dot_dimension_numbers<[1], [0], [0], [1], [0, 0, 1, 1], [], []>} : vector<8x32xbf16>, vector<32x64xbf16>, vector<8x64xf32> -> vector<8x64xf32>
    %86 = vector.broadcast %11 : vector<1x64xf32> to vector<8x64xf32>
    %87 = arith.addf %85, %86 : vector<8x64xf32>
    %cst_38 = arith.constant 0.000000e+00 : f32
    %88 = vector.broadcast %cst_38 : f32 to vector<8x64xf32>
    %89 = arith.maximumf %87, %88 : vector<8x64xf32>
    %90 = arith.truncf %89 : vector<8x64xf32> to vector<8x64xbf16>
    %cst_39 = arith.constant dense<0.000000e+00> : vector<8x32xf32>
    %91 = tpu.matmul %90, %9, %cst_39 {dimension_numbers = #tpu.dot_dimension_numbers<[1], [0], [0], [1], [0, 0, 1, 1], [], []>} : vector<8x64xbf16>, vector<64x32xbf16>, vector<8x32xf32> -> vector<8x32xf32>
    %92 = vector.broadcast %13 : vector<1x32xf32> to vector<8x32xf32>
    %93 = arith.addf %91, %92 : vector<8x32xf32>
    %94 = arith.addf %83, %93 : vector<8x32xf32>
    %cst_40 = arith.constant dense<0.000000e+00> : vector<8xf32>
    %95 = vector.multi_reduction <add>, %94, %cst_40 [1] : vector<8x32xf32> to vector<8xf32>
    %96 = vector.shape_cast %95 : vector<8xf32> to vector<8x1xf32>
    %cst_41 = arith.constant 3.200000e+01 : f32
    %97 = vector.broadcast %cst_41 : f32 to vector<8x1xf32>
    %98 = arith.divf %96, %97 : vector<8x1xf32>
    %99 = vector.broadcast %98 : vector<8x1xf32> to vector<8x32xf32>
    %100 = arith.subf %94, %99 : vector<8x32xf32>
    %101 = arith.mulf %100, %100 : vector<8x32xf32>
    %cst_42 = arith.constant dense<0.000000e+00> : vector<8xf32>
    %102 = vector.multi_reduction <add>, %101, %cst_42 [1] : vector<8x32xf32> to vector<8xf32>
    %103 = vector.shape_cast %102 : vector<8xf32> to vector<8x1xf32>
    %cst_43 = arith.constant 3.200000e+01 : f32
    %104 = vector.broadcast %cst_43 : f32 to vector<8x1xf32>
    %105 = arith.divf %103, %104 : vector<8x1xf32>
    %cst_44 = arith.constant 9.99999974E-6 : f32
    %106 = vector.broadcast %cst_44 : f32 to vector<8x1xf32>
    %107 = arith.addf %105, %106 : vector<8x1xf32>
    %108 = math.rsqrt %107 : vector<8x1xf32>
    %109 = vector.broadcast %108 : vector<8x1xf32> to vector<8x32xf32>
    %110 = arith.mulf %100, %109 : vector<8x32xf32>
    %c1 = arith.constant 1 : index
    %c0_45 = arith.constant 0 : index
    %c0_46 = arith.constant 0 : index
    %111 = vector.load %arg3[%c1, %c0_45, %c0_46] : memref<2x64x224xbf16, #tpu.memory_space<vmem>>, vector<1x32x96xbf16>
    %112 = vector.shape_cast %111 : vector<1x32x96xbf16> to vector<32x96xbf16>
    %c1_47 = arith.constant 1 : index
    %c0_48 = arith.constant 0 : index
    %c128_49 = arith.constant 128 : index
    %113 = vector.load %arg3[%c1_47, %c0_48, %c128_49] : memref<2x64x224xbf16, #tpu.memory_space<vmem>>, vector<1x32x64xbf16>
    %114 = vector.shape_cast %113 : vector<1x32x64xbf16> to vector<32x64xbf16>
    %c1_50 = arith.constant 1 : index
    %c0_51 = arith.constant 0 : index
    %c192_52 = arith.constant 192 : index
    %115 = vector.load %arg3[%c1_50, %c0_51, %c192_52] : memref<2x64x224xbf16, #tpu.memory_space<vmem>>, vector<1x64x32xbf16>
    %116 = vector.shape_cast %115 : vector<1x64x32xbf16> to vector<64x32xbf16>
    %c1_53 = arith.constant 1 : index
    %c0_54 = arith.constant 0 : index
    %c0_55 = arith.constant 0 : index
    %117 = vector.load %arg4[%c1_53, %c0_54, %c0_55] : memref<2x1x96xf32, #tpu.memory_space<vmem>>, vector<1x1x64xf32>
    %118 = vector.shape_cast %117 : vector<1x1x64xf32> to vector<1x64xf32>
    %c1_56 = arith.constant 1 : index
    %c0_57 = arith.constant 0 : index
    %c64_58 = arith.constant 64 : index
    %119 = vector.load %arg4[%c1_56, %c0_57, %c64_58] : memref<2x1x96xf32, #tpu.memory_space<vmem>>, vector<1x1x32xf32>
    %120 = vector.shape_cast %119 : vector<1x1x32xf32> to vector<1x32xf32>
    %121 = arith.truncf %110 : vector<8x32xf32> to vector<8x32xbf16>
    %cst_59 = arith.constant dense<0.000000e+00> : vector<8x96xf32>
    %122 = tpu.matmul %121, %112, %cst_59 {dimension_numbers = #tpu.dot_dimension_numbers<[1], [0], [0], [1], [0, 0, 1, 1], [], []>} : vector<8x32xbf16>, vector<32x96xbf16>, vector<8x96xf32> -> vector<8x96xf32>
    %cst_60 = arith.constant 0.000000e+00 : f32
    %123 = vector.broadcast %cst_60 : f32 to vector<8x32xf32>
    %124 = vector.extract_strided_slice %122 {offsets = [0, 0], sizes = [8, 16], strides = [1, 1]} : vector<8x96xf32> to vector<8x16xf32>
    %125 = arith.truncf %124 : vector<8x16xf32> to vector<8x16xbf16>
    %126 = vector.extract_strided_slice %122 {offsets = [0, 32], sizes = [8, 16], strides = [1, 1]} : vector<8x96xf32> to vector<8x16xf32>
    %127 = arith.truncf %126 : vector<8x16xf32> to vector<8x16xbf16>
    %128 = vector.extract_strided_slice %122 {offsets = [0, 64], sizes = [8, 16], strides = [1, 1]} : vector<8x96xf32> to vector<8x16xf32>
    %129 = arith.truncf %128 : vector<8x16xf32> to vector<8x16xbf16>
    %cst_61 = arith.constant dense<0.000000e+00> : vector<8x8xf32>
    %130 = tpu.matmul %125, %127, %cst_61 {dimension_numbers = #tpu.dot_dimension_numbers<[1], [1], [0], [0], [0, 0, 1, 0], [], []>} : vector<8x16xbf16>, vector<8x16xbf16>, vector<8x8xf32> -> vector<8x8xf32>
    %131 = arith.addf %130, %3 : vector<8x8xf32>
    %cst_62 = arith.constant dense<0xFF800000> : vector<8xf32>
    %132 = vector.multi_reduction <maximumf>, %131, %cst_62 [1] : vector<8x8xf32> to vector<8xf32>
    %133 = vector.shape_cast %132 : vector<8xf32> to vector<8x1xf32>
    %134 = vector.broadcast %133 : vector<8x1xf32> to vector<8x8xf32>
    %135 = arith.subf %131, %134 : vector<8x8xf32>
    %136 = math.exp %135 : vector<8x8xf32>
    %cst_63 = arith.constant dense<0.000000e+00> : vector<8xf32>
    %137 = vector.multi_reduction <add>, %136, %cst_63 [1] : vector<8x8xf32> to vector<8xf32>
    %138 = vector.shape_cast %137 : vector<8xf32> to vector<8x1xf32>
    %139 = tpu.reciprocal %138 {approx = true} : vector<8x1xf32> -> vector<8x1xf32>
    %140 = vector.broadcast %139 : vector<8x1xf32> to vector<8x8xf32>
    %141 = arith.mulf %136, %140 : vector<8x8xf32>
    %142 = arith.truncf %141 : vector<8x8xf32> to vector<8x8xbf16>
    %cst_64 = arith.constant dense<0.000000e+00> : vector<8x16xf32>
    %143 = tpu.matmul %142, %129, %cst_64 {dimension_numbers = #tpu.dot_dimension_numbers<[1], [0], [0], [1], [0, 0, 1, 1], [], []>} : vector<8x8xbf16>, vector<8x16xbf16>, vector<8x16xf32> -> vector<8x16xf32>
    %c1_65 = arith.constant 1 : index
    %c0_66 = arith.constant 0 : index
    %c96_67 = arith.constant 96 : index
    %144 = vector.load %arg3[%c1_65, %c0_66, %c96_67] : memref<2x64x224xbf16, #tpu.memory_space<vmem>>, vector<1x16x32xbf16>
    %145 = vector.shape_cast %144 : vector<1x16x32xbf16> to vector<16x32xbf16>
    %146 = arith.truncf %143 : vector<8x16xf32> to vector<8x16xbf16>
    %cst_68 = arith.constant dense<0.000000e+00> : vector<8x32xf32>
    %147 = tpu.matmul %146, %145, %cst_68 {dimension_numbers = #tpu.dot_dimension_numbers<[1], [0], [0], [1], [0, 0, 1, 1], [], []>} : vector<8x16xbf16>, vector<16x32xbf16>, vector<8x32xf32> -> vector<8x32xf32>
    %148 = arith.addf %123, %147 : vector<8x32xf32>
    %149 = vector.extract_strided_slice %122 {offsets = [0, 16], sizes = [8, 16], strides = [1, 1]} : vector<8x96xf32> to vector<8x16xf32>
    %150 = arith.truncf %149 : vector<8x16xf32> to vector<8x16xbf16>
    %151 = vector.extract_strided_slice %122 {offsets = [0, 48], sizes = [8, 16], strides = [1, 1]} : vector<8x96xf32> to vector<8x16xf32>
    %152 = arith.truncf %151 : vector<8x16xf32> to vector<8x16xbf16>
    %153 = vector.extract_strided_slice %122 {offsets = [0, 80], sizes = [8, 16], strides = [1, 1]} : vector<8x96xf32> to vector<8x16xf32>
    %154 = arith.truncf %153 : vector<8x16xf32> to vector<8x16xbf16>
    %cst_69 = arith.constant dense<0.000000e+00> : vector<8x8xf32>
    %155 = tpu.matmul %150, %152, %cst_69 {dimension_numbers = #tpu.dot_dimension_numbers<[1], [1], [0], [0], [0, 0, 1, 0], [], []>} : vector<8x16xbf16>, vector<8x16xbf16>, vector<8x8xf32> -> vector<8x8xf32>
    %156 = arith.addf %155, %3 : vector<8x8xf32>
    %cst_70 = arith.constant dense<0xFF800000> : vector<8xf32>
    %157 = vector.multi_reduction <maximumf>, %156, %cst_70 [1] : vector<8x8xf32> to vector<8xf32>
    %158 = vector.shape_cast %157 : vector<8xf32> to vector<8x1xf32>
    %159 = vector.broadcast %158 : vector<8x1xf32> to vector<8x8xf32>
    %160 = arith.subf %156, %159 : vector<8x8xf32>
    %161 = math.exp %160 : vector<8x8xf32>
    %cst_71 = arith.constant dense<0.000000e+00> : vector<8xf32>
    %162 = vector.multi_reduction <add>, %161, %cst_71 [1] : vector<8x8xf32> to vector<8xf32>
    %163 = vector.shape_cast %162 : vector<8xf32> to vector<8x1xf32>
    %164 = tpu.reciprocal %163 {approx = true} : vector<8x1xf32> -> vector<8x1xf32>
    %165 = vector.broadcast %164 : vector<8x1xf32> to vector<8x8xf32>
    %166 = arith.mulf %161, %165 : vector<8x8xf32>
    %167 = arith.truncf %166 : vector<8x8xf32> to vector<8x8xbf16>
    %cst_72 = arith.constant dense<0.000000e+00> : vector<8x16xf32>
    %168 = tpu.matmul %167, %154, %cst_72 {dimension_numbers = #tpu.dot_dimension_numbers<[1], [0], [0], [1], [0, 0, 1, 1], [], []>} : vector<8x8xbf16>, vector<8x16xbf16>, vector<8x16xf32> -> vector<8x16xf32>
    %c1_73 = arith.constant 1 : index
    %c16_74 = arith.constant 16 : index
    %c96_75 = arith.constant 96 : index
    %169 = vector.load %arg3[%c1_73, %c16_74, %c96_75] : memref<2x64x224xbf16, #tpu.memory_space<vmem>>, vector<1x16x32xbf16>
    %170 = vector.shape_cast %169 : vector<1x16x32xbf16> to vector<16x32xbf16>
    %171 = arith.truncf %168 : vector<8x16xf32> to vector<8x16xbf16>
    %cst_76 = arith.constant dense<0.000000e+00> : vector<8x32xf32>
    %172 = tpu.matmul %171, %170, %cst_76 {dimension_numbers = #tpu.dot_dimension_numbers<[1], [0], [0], [1], [0, 0, 1, 1], [], []>} : vector<8x16xbf16>, vector<16x32xbf16>, vector<8x32xf32> -> vector<8x32xf32>
    %173 = arith.addf %148, %172 : vector<8x32xf32>
    %174 = arith.addf %110, %173 : vector<8x32xf32>
    %cst_77 = arith.constant dense<0.000000e+00> : vector<8xf32>
    %175 = vector.multi_reduction <add>, %174, %cst_77 [1] : vector<8x32xf32> to vector<8xf32>
    %176 = vector.shape_cast %175 : vector<8xf32> to vector<8x1xf32>
    %cst_78 = arith.constant 3.200000e+01 : f32
    %177 = vector.broadcast %cst_78 : f32 to vector<8x1xf32>
    %178 = arith.divf %176, %177 : vector<8x1xf32>
    %179 = vector.broadcast %178 : vector<8x1xf32> to vector<8x32xf32>
    %180 = arith.subf %174, %179 : vector<8x32xf32>
    %181 = arith.mulf %180, %180 : vector<8x32xf32>
    %cst_79 = arith.constant dense<0.000000e+00> : vector<8xf32>
    %182 = vector.multi_reduction <add>, %181, %cst_79 [1] : vector<8x32xf32> to vector<8xf32>
    %183 = vector.shape_cast %182 : vector<8xf32> to vector<8x1xf32>
    %cst_80 = arith.constant 3.200000e+01 : f32
    %184 = vector.broadcast %cst_80 : f32 to vector<8x1xf32>
    %185 = arith.divf %183, %184 : vector<8x1xf32>
    %cst_81 = arith.constant 9.99999974E-6 : f32
    %186 = vector.broadcast %cst_81 : f32 to vector<8x1xf32>
    %187 = arith.addf %185, %186 : vector<8x1xf32>
    %188 = math.rsqrt %187 : vector<8x1xf32>
    %189 = vector.broadcast %188 : vector<8x1xf32> to vector<8x32xf32>
    %190 = arith.mulf %180, %189 : vector<8x32xf32>
    %191 = arith.truncf %190 : vector<8x32xf32> to vector<8x32xbf16>
    %cst_82 = arith.constant dense<0.000000e+00> : vector<8x64xf32>
    %192 = tpu.matmul %191, %114, %cst_82 {dimension_numbers = #tpu.dot_dimension_numbers<[1], [0], [0], [1], [0, 0, 1, 1], [], []>} : vector<8x32xbf16>, vector<32x64xbf16>, vector<8x64xf32> -> vector<8x64xf32>
    %193 = vector.broadcast %118 : vector<1x64xf32> to vector<8x64xf32>
    %194 = arith.addf %192, %193 : vector<8x64xf32>
    %cst_83 = arith.constant 0.000000e+00 : f32
    %195 = vector.broadcast %cst_83 : f32 to vector<8x64xf32>
    %196 = arith.maximumf %194, %195 : vector<8x64xf32>
    %197 = arith.truncf %196 : vector<8x64xf32> to vector<8x64xbf16>
    %cst_84 = arith.constant dense<0.000000e+00> : vector<8x32xf32>
    %198 = tpu.matmul %197, %116, %cst_84 {dimension_numbers = #tpu.dot_dimension_numbers<[1], [0], [0], [1], [0, 0, 1, 1], [], []>} : vector<8x64xbf16>, vector<64x32xbf16>, vector<8x32xf32> -> vector<8x32xf32>
    %199 = vector.broadcast %120 : vector<1x32xf32> to vector<8x32xf32>
    %200 = arith.addf %198, %199 : vector<8x32xf32>
    %201 = arith.addf %190, %200 : vector<8x32xf32>
    %cst_85 = arith.constant dense<0.000000e+00> : vector<8xf32>
    %202 = vector.multi_reduction <add>, %201, %cst_85 [1] : vector<8x32xf32> to vector<8xf32>
    %203 = vector.shape_cast %202 : vector<8xf32> to vector<8x1xf32>
    %cst_86 = arith.constant 3.200000e+01 : f32
    %204 = vector.broadcast %cst_86 : f32 to vector<8x1xf32>
    %205 = arith.divf %203, %204 : vector<8x1xf32>
    %206 = vector.broadcast %205 : vector<8x1xf32> to vector<8x32xf32>
    %207 = arith.subf %201, %206 : vector<8x32xf32>
    %208 = arith.mulf %207, %207 : vector<8x32xf32>
    %cst_87 = arith.constant dense<0.000000e+00> : vector<8xf32>
    %209 = vector.multi_reduction <add>, %208, %cst_87 [1] : vector<8x32xf32> to vector<8xf32>
    %210 = vector.shape_cast %209 : vector<8xf32> to vector<8x1xf32>
    %cst_88 = arith.constant 3.200000e+01 : f32
    %211 = vector.broadcast %cst_88 : f32 to vector<8x1xf32>
    %212 = arith.divf %210, %211 : vector<8x1xf32>
    %cst_89 = arith.constant 9.99999974E-6 : f32
    %213 = vector.broadcast %cst_89 : f32 to vector<8x1xf32>
    %214 = arith.addf %212, %213 : vector<8x1xf32>
    %215 = math.rsqrt %214 : vector<8x1xf32>
    %216 = vector.broadcast %215 : vector<8x1xf32> to vector<8x32xf32>
    %217 = arith.mulf %207, %216 : vector<8x32xf32>
    %218 = arith.truncf %217 : vector<8x32xf32> to vector<8x32xbf16>
    %c0_90 = arith.constant 0 : index
    %c0_91 = arith.constant 0 : index
    %219 = vector.load %arg5[%c0_90, %c0_91] : memref<32x128xbf16, #tpu.memory_space<vmem>>, vector<32x128xbf16>
    %cst_92 = arith.constant dense<0.000000e+00> : vector<8x128xf32>
    %220 = tpu.matmul %218, %219, %cst_92 {dimension_numbers = #tpu.dot_dimension_numbers<[1], [0], [0], [1], [0, 0, 1, 1], [], []>} : vector<8x32xbf16>, vector<32x128xbf16>, vector<8x128xf32> -> vector<8x128xf32>
    %c0_93 = arith.constant 0 : index
    %c0_94 = arith.constant 0 : index
    %221 = vector.load %arg6[%c0_93, %c0_94] : memref<1x128xf32, #tpu.memory_space<vmem>>, vector<1x128xf32>
    %222 = vector.broadcast %221 : vector<1x128xf32> to vector<8x128xf32>
    %223 = arith.addf %220, %222 : vector<8x128xf32>
    %c0_95 = arith.constant 0 : index
    %c0_96 = arith.constant 0 : index
    %c0_97 = arith.constant 0 : index
    %224 = vector.load %arg7[%c0_95, %c0_96, %c0_97] : memref<1x8x128xf32, #tpu.memory_space<vmem>>, vector<1x8x128xf32>
    %225 = vector.shape_cast %224 : vector<1x8x128xf32> to vector<8x128xf32>
    %226 = vector.shape_cast %223 : vector<8x128xf32> to vector<1x8x128xf32>
    tpu.vector_store %arg7[%c0_95, %c0_96, %c0_97], %226 {strides = array<i32>} : memref<1x8x128xf32, #tpu.memory_space<vmem>>, vector<1x8x128xf32>,
    return
  }
  func.func @transform_0(%arg0: i32) -> (i32, i32, i32) {
    %c0_i32 = arith.constant 0 : i32
    %c0_i32_0 = arith.constant 0 : i32
    %c0_i32_1 = arith.constant 0 : i32
    return %arg0, %c0_i32, %c0_i32_0 : i32, i32, i32
  }
  func.func @transform_1(%arg0: i32) -> (i32, i32, i32) {
    %c0_i32 = arith.constant 0 : i32
    %c0_i32_0 = arith.constant 0 : i32
    %c0_i32_1 = arith.constant 0 : i32
    return %arg0, %c0_i32, %c0_i32_0 : i32, i32, i32
  }
  func.func @transform_2(%arg0: i32) -> (i32, i32, i32) {
    %c0_i32 = arith.constant 0 : i32
    %c0_i32_0 = arith.constant 0 : i32
    %c0_i32_1 = arith.constant 0 : i32
    %c0_i32_2 = arith.constant 0 : i32
    return %c0_i32, %c0_i32_0, %c0_i32_1 : i32, i32, i32
  }
  func.func @transform_3(%arg0: i32) -> (i32, i32, i32) {
    %c0_i32 = arith.constant 0 : i32
    %c0_i32_0 = arith.constant 0 : i32
    %c0_i32_1 = arith.constant 0 : i32
    %c0_i32_2 = arith.constant 0 : i32
    return %c0_i32, %c0_i32_0, %c0_i32_1 : i32, i32, i32
  }
  func.func @transform_4(%arg0: i32) -> (i32, i32) {
    %c0_i32 = arith.constant 0 : i32
    %c0_i32_0 = arith.constant 0 : i32
    %c0_i32_1 = arith.constant 0 : i32
    return %c0_i32, %c0_i32_0 : i32, i32
  }
  func.func @transform_5(%arg0: i32) -> (i32, i32) {
    %c0_i32 = arith.constant 0 : i32
    %c0_i32_0 = arith.constant 0 : i32
    %c0_i32_1 = arith.constant 0 : i32
    return %c0_i32, %c0_i32_0 : i32, i32
  }
  func.func @transform_6(%arg0: i32) -> (i32, i32, i32) {
    %c0_i32 = arith.constant 0 : i32
    %c0_i32_0 = arith.constant 0 : i32
    %c0_i32_1 = arith.constant 0 : i32
    return %arg0, %c0_i32, %c0_i32_0 : i32, i32, i32
  }
}

</mosaic_0001>

<llo_original>
// kernel: tpu_custom_call.1
$region0: #{tpu_custom_call.1}
  #allocation0 [shape = 'u32[]', space=smem, size = 0x4, offset = 0x4, fixed_abs, tag = 'smem constant byte address 0x4 - core index']
  #allocation1 [shape = 'u32[72,128]{1,0:T(1,128)}', space=vmem, size = 0x9000, scoped, tag = 'internal scratch']
  %s0 = inlined_call_operand.hbm [shape: f32[2,8,32], index: 0, kind: input, shape index: {}]
  %s1 = inlined_call_operand.hbm [shape: f32[2,8,8], index: 1, kind: input, shape index: {}]
  %s2 = inlined_call_operand.hbm [shape: bf16[2,64,224], index: 2, kind: input, shape index: {}]
  %s3 = inlined_call_operand.vmem [shape: f32[2,1,96], index: 3, kind: input, shape index: {}]
  %s4 = inlined_call_operand.hbm [shape: bf16[32,128], index: 4, kind: input, shape index: {}]
  %s5 = inlined_call_operand.vmem [shape: f32[1,128], index: 5, kind: input, shape index: {}]
  %s6 = inlined_call_operand.hbm [shape: f32[2,8,128], index: 6, kind: output, shape index: {}]
  %s7 = sld [smem:[#allocation0]]
  $region73: #{tpu_custom_call.1} parent=0
    _
  %s9 = ssub.s32 1, %s7
  %s10 = scalar_select 0, %s9, %s7
  $region1: #{tpu_custom_call.1} parent=0
    #allocation2 [shape = 'u8[8192]{0}', space=vmem, size = 0x2000, scoped, tag = 'input window, operand 0']
    #allocation3 [shape = 's32[2]{0}', space=sflag, size = 0x8, scoped, tag = 'scoped memory for tpu_custom_call.1']
    #allocation4 [shape = 's32[2]{0}', space=sflag, size = 0x8, scoped, tag = 'scoped memory for tpu_custom_call.1']
    #allocation5 [shape = 'u8[8192]{0}', space=vmem, size = 0x2000, scoped, tag = 'input window, operand 1']
    #allocation6 [shape = 's32[2]{0}', space=sflag, size = 0x8, scoped, tag = 'scoped memory for tpu_custom_call.1']
    #allocation7 [shape = 'u8[65536]{0}', space=vmem, size = 0x10000, scoped, tag = 'input window, operand 2, single buffered']
    #allocation8 [shape = 'u8[8192]{0}', space=vmem, size = 0x2000, scoped, tag = 'input window, operand 4, single buffered']
    #allocation9 [shape = 's32[1]{0}', space=sflag, size = 0x4, scoped, tag = 'scoped memory for tpu_custom_call.1']
    #allocation10 [shape = 'u8[8192]{0}', space=vmem, size = 0x2000, scoped, tag = 'output window, operand 0']
    %11 = vsyncpa [#allocation3], 0
    %s12 = scalar_lea.sflag [#allocation3], 1
    %13 = vsyncpa %s12, 0
    %14 = vsyncpa [#allocation6], 0
    %s15 = scalar_lea.sflag [#allocation6], 1
    %16 = vsyncpa %s15, 0
    %17 = vsyncpa [#allocation9], 0
    %18 = vsyncpa [#allocation4], 0
    %s19 = scalar_lea.sflag [#allocation4], 1
    %20 = vsyncpa %s19, 0
    loop: start=0, step=1, limit=4
    $region2: #{tpu_custom_call.1} parent=1 // loop_pre_header
      _
    $region3: #{tpu_custom_call.1} parent=1 // loop_header
      %s22 = sphi 0, %s26
      %p23 = scmp.ge.s32.totalorder %s22, 4
      %s32 = sphi 0, %s34
      %s35 = sphi 0, %s32
      %s36 = sphi 0, %s35
      %s52 = sphi 0, %s36
      %s58 = sphi 0, %s60
      %s61 = sphi 0, %s58
      %s62 = sphi 0, %s61
      %s78 = sphi 0, %s62
      %s82 = sphi 0, %s82
      %s84 = sphi 0, %s82
      %s85 = sphi 0, %s84
      %s99 = sphi 0, %s85
      %s103 = sphi 0, %s103
      %s105 = sphi 0, %s103
      %s106 = sphi 0, %s105
      %s120 = sphi 0, %s106
      %s124 = sphi 0, %s124
      %s126 = sphi 0, %s124
      %s127 = sphi 0, %s126
      %s141 = sphi 0, %s127
      %s145 = sphi 0, %s145
      %s147 = sphi 0, %s145
      %s148 = sphi 0, %s147
      %s162 = sphi 0, %s148
      %s168 = sphi 0, %s170
      %s171 = sphi 0, %s168
      %s172 = sphi 0, %s171
      %s188 = sphi 0, %s172
    $region4: #{tpu_custom_call.1} parent=1 // loop_header_branch
      %25 = sbr.rel (%p23) target = $region8
    $region5: #{tpu_custom_call.1} parent=1 // loop_body
      %s27 = ssub.s32 %s22, 1
      %s28 = ssub.s32 %s22, 2
      %s29 = sadd.s32 %s22, 1
      %s30 = ssub.s32 %s22, %s29
      %p31 = scmp.eq.s32.totalorder %s30, 0
      %s33 = sadd.s32 %s32, 1
      %s34 = scalar_select %p31, %s32, %s33
      %p37 = pneg %p31
      %p38 = scmp.eq.s32.totalorder %s22, 1
      %p39 = por %p37, %p38
      %p40 = scmp.ne.s32.totalorder %s32, %s35
      %p41 = scmp.eq.s32.totalorder %s22, 0
      %p42 = por %p40, %p41
      %p43 = scmp.ne.s32.totalorder %s32, %s35
      %p44 = scmp.eq.s32.totalorder %s27, 1
      %p45 = por %p43, %p44
      %p46 = scmp.ne.s32.totalorder %s35, %s36
      %p47 = scmp.eq.s32.totalorder %s27, 0
      %p48 = por %p46, %p47
      %p49 = scmp.ne.s32.totalorder %s35, %s36
      %p50 = scmp.eq.s32.totalorder %s28, 1
      %p51 = por %p49, %p50
      %p53 = scmp.ne.s32.totalorder %s36, %s52
      %p54 = scmp.eq.s32.totalorder %s28, 0
      %p55 = por %p53, %p54
      %s56 = ssub.s32 %s22, %s29
      %p57 = scmp.eq.s32.totalorder %s56, 0
      %s59 = sadd.s32 %s58, 1
      %s60 = scalar_select %p57, %s58, %s59
      %p63 = pneg %p57
      %p64 = scmp.eq.s32.totalorder %s22, 1
      %p65 = por %p63, %p64
      %p66 = scmp.ne.s32.totalorder %s58, %s61
      %p67 = scmp.eq.s32.totalorder %s22, 0
      %p68 = por %p66, %p67
      %p69 = scmp.ne.s32.totalorder %s58, %s61
      %p70 = scmp.eq.s32.totalorder %s27, 1
      %p71 = por %p69, %p70
      %p72 = scmp.ne.s32.totalorder %s61, %s62
      %p73 = scmp.eq.s32.totalorder %s27, 0
      %p74 = por %p72, %p73
      %p75 = scmp.ne.s32.totalorder %s61, %s62
      %p76 = scmp.eq.s32.totalorder %s28, 1
      %p77 = por %p75, %p76
      %p79 = scmp.ne.s32.totalorder %s62, %s78
      %p80 = scmp.eq.s32.totalorder %s28, 0
      %p81 = por %p79, %p80
      %s83 = sadd.s32 %s82, 1
      %p86 = scmp.eq.s32.totalorder %s22, 1
      %p87 = scmp.ne.s32.totalorder %s82, %s84
      %p88 = scmp.eq.s32.totalorder %s22, 0
      %p89 = por %p87, %p88
      %p90 = scmp.ne.s32.totalorder %s82, %s84
      %p91 = scmp.eq.s32.totalorder %s27, 1
      %p92 = por %p90, %p91
      %p93 = scmp.ne.s32.totalorder %s84, %s85
      %p94 = scmp.eq.s32.totalorder %s27, 0
      %p95 = por %p93, %p94
      %p96 = scmp.ne.s32.totalorder %s84, %s85
      %p97 = scmp.eq.s32.totalorder %s28, 1
      %p98 = por %p96, %p97
      %p100 = scmp.ne.s32.totalorder %s85, %s99
      %p101 = scmp.eq.s32.totalorder %s28, 0
      %p102 = por %p100, %p101
      %s104 = sadd.s32 %s103, 1
      %p107 = scmp.eq.s32.totalorder %s22, 1
      %p108 = scmp.ne.s32.totalorder %s103, %s105
      %p109 = scmp.eq.s32.totalorder %s22, 0
      %p110 = por %p108, %p109
      %p111 = scmp.ne.s32.totalorder %s103, %s105
      %p112 = scmp.eq.s32.totalorder %s27, 1
      %p113 = por %p111, %p112
      %p114 = scmp.ne.s32.totalorder %s105, %s106
      %p115 = scmp.eq.s32.totalorder %s27, 0
      %p116 = por %p114, %p115
      %p117 = scmp.ne.s32.totalorder %s105, %s106
      %p118 = scmp.eq.s32.totalorder %s28, 1
      %p119 = por %p117, %p118
      %p121 = scmp.ne.s32.totalorder %s106, %s120
      %p122 = scmp.eq.s32.totalorder %s28, 0
      %p123 = por %p121, %p122
      %s125 = sadd.s32 %s124, 1
      %p128 = scmp.eq.s32.totalorder %s22, 1
      %p129 = scmp.ne.s32.totalorder %s124, %s126
      %p130 = scmp.eq.s32.totalorder %s22, 0
      %p131 = por %p129, %p130
      %p132 = scmp.ne.s32.totalorder %s124, %s126
      %p133 = scmp.eq.s32.totalorder %s27, 1
      %p134 = por %p132, %p133
      %p135 = scmp.ne.s32.totalorder %s126, %s127
      %p136 = scmp.eq.s32.totalorder %s27, 0
      %p137 = por %p135, %p136
      %p138 = scmp.ne.s32.totalorder %s126, %s127
      %p139 = scmp.eq.s32.totalorder %s28, 1
      %p140 = por %p138, %p139
      %p142 = scmp.ne.s32.totalorder %s127, %s141
      %p143 = scmp.eq.s32.totalorder %s28, 0
      %p144 = por %p142, %p143
      %s146 = sadd.s32 %s145, 1
      %p149 = scmp.eq.s32.totalorder %s22, 1
      %p150 = scmp.ne.s32.totalorder %s145, %s147
      %p151 = scmp.eq.s32.totalorder %s22, 0
      %p152 = por %p150, %p151
      %p153 = scmp.ne.s32.totalorder %s145, %s147
      %p154 = scmp.eq.s32.totalorder %s27, 1
      %p155 = por %p153, %p154
      %p156 = scmp.ne.s32.totalorder %s147, %s148
      %p157 = scmp.eq.s32.totalorder %s27, 0
      %p158 = por %p156, %p157
      %p159 = scmp.ne.s32.totalorder %s147, %s148
      %p160 = scmp.eq.s32.totalorder %s28, 1
      %p161 = por %p159, %p160
      %p163 = scmp.ne.s32.totalorder %s148, %s162
      %p164 = scmp.eq.s32.totalorder %s28, 0
      %p165 = por %p163, %p164
      %s166 = ssub.s32 %s22, %s29
      %p167 = scmp.eq.s32.totalorder %s166, 0
      %s169 = sadd.s32 %s168, 1
      %s170 = scalar_select %p167, %s168, %s169
      %p173 = pneg %p167
      %p174 = scmp.eq.s32.totalorder %s22, 1
      %p175 = por %p173, %p174
      %p176 = scmp.ne.s32.totalorder %s168, %s171
      %p177 = scmp.eq.s32.totalorder %s22, 0
      %p178 = por %p176, %p177
      %p179 = scmp.ne.s32.totalorder %s168, %s171
      %p180 = scmp.eq.s32.totalorder %s27, 1
      %p181 = por %p179, %p180
      %p182 = scmp.ne.s32.totalorder %s171, %s172
      %p183 = scmp.eq.s32.totalorder %s27, 0
      %p184 = por %p182, %p183
      %p185 = scmp.ne.s32.totalorder %s171, %s172
      %p186 = scmp.eq.s32.totalorder %s28, 1
      %p187 = por %p185, %p186
      %p189 = scmp.ne.s32.totalorder %s172, %s188
      %p190 = scmp.eq.s32.totalorder %s28, 0
      %p191 = por %p189, %p190
      %p192 = scmp.le.s32.totalorder 1, %s22
      %p193 = scmp.lt.s32.totalorder %s22, 3
      %p194 = pnand %p192, %p193
      %p195 = pneg %p194
      // Predicated region
      $region9: #{tpu_custom_call.1} parent=5 // pred_check
        _
      $region10: #{tpu_custom_call.1} parent=5 // pred_check_branch
        %197 = sbr.rel (%p194) target = $region12
      $region11: #{tpu_custom_call.1} parent=5 // pred_region
        %s198 = ssub.s32 %s22, 1
        // Predicated region
        $region13: #{tpu_custom_call.1} parent=11 // pred_check
          %p199 = pneg %p95
        $region14: #{tpu_custom_call.1} parent=11 // pred_check_branch
          %201 = sbr.rel (%p199) target = $region16
        $region15: #{tpu_custom_call.1} parent=11 // pred_region
          %203 = vsyncadd [#allocation6], 0
          %s204 = sshll.u32 %s2, 4
          %s205 = int_to_ptr.hbm [resolvable:$true] %s204
          %s206 = sshll.u32 [#allocation7], 4
          %s207 = int_to_ptr.vmem [resolvable:$true] %s206
          %212 = dma.hbm_to_vmem [thread:$0]  %s205, 2048, %s207, [#allocation6], 128, 128, 8
        $region16: #{tpu_custom_call.1} parent=11 // pred_fallthru
          _
        // Predicated region
        $region17: #{tpu_custom_call.1} parent=11 // pred_check
          %p213 = pneg %p116
        $region18: #{tpu_custom_call.1} parent=11 // pred_check_branch
          %215 = sbr.rel (%p213) target = $region20
        $region19: #{tpu_custom_call.1} parent=11 // pred_region
          _
        $region20: #{tpu_custom_call.1} parent=11 // pred_fallthru
          _
        // Predicated region
        $region21: #{tpu_custom_call.1} parent=11 // pred_check
          %p216 = pneg %p137
        $region22: #{tpu_custom_call.1} parent=11 // pred_check_branch
          %218 = sbr.rel (%p216) target = $region24
        $region23: #{tpu_custom_call.1} parent=11 // pred_region
          %220 = vsyncadd [#allocation9], 0
          %s221 = sshll.u32 %s4, 4
          %s222 = int_to_ptr.hbm [resolvable:$true] %s221
          %s223 = sshll.u32 [#allocation8], 4
          %s224 = int_to_ptr.vmem [resolvable:$true] %s223
          %229 = dma.hbm_to_vmem [thread:$0]  %s222, 256, %s224, [#allocation9], 64, 64, 4
        $region24: #{tpu_custom_call.1} parent=11 // pred_fallthru
          _
        // Predicated region
        $region25: #{tpu_custom_call.1} parent=11 // pred_check
          %p230 = pneg %p158
        $region26: #{tpu_custom_call.1} parent=11 // pred_check_branch
          %232 = sbr.rel (%p230) target = $region28
        $region27: #{tpu_custom_call.1} parent=11 // pred_region
          _
        $region28: #{tpu_custom_call.1} parent=11 // pred_fallthru
          _
      $region12: #{tpu_custom_call.1} parent=5 // pred_fallthru
        _
      %p233 = scmp.lt.s32.totalorder %s22, 2
      // Predicated region
      $region29: #{tpu_custom_call.1} parent=5 // pred_check
        %p234 = pneg %p233
      $region30: #{tpu_custom_call.1} parent=5 // pred_check_branch
        %236 = sbr.rel (%p234) target = $region32
      $region31: #{tpu_custom_call.1} parent=5 // pred_region
        // Predicated region
        $region33: #{tpu_custom_call.1} parent=31 // pred_check
          %p237 = pneg %p42
        $region34: #{tpu_custom_call.1} parent=31 // pred_check_branch
          %239 = sbr.rel (%p237) target = $region36
        $region35: #{tpu_custom_call.1} parent=31 // pred_region
          %s240 = sand.u32 %s32, 1
          %s241 = scalar_lea.sflag [#allocation3], %s240
          %s242 = sand.u32 %s32, 1
          %s243 = smul.addr %s242, 8
          %s244 = scalar_lea.vmem [#allocation2], %s243
          %246 = vsyncadd %s241, 0
          %s247 = smul.addr %s22, 8
          %s248 = scalar_lea.hbm %s0, %s247
          %s250 = sshll.u32 %s248, 4
          %s251 = int_to_ptr.hbm [resolvable:$true] %s250
          %s252 = sshll.u32 %s244, 4
          %s253 = int_to_ptr.vmem [resolvable:$true] %s252
          %255 = dma.hbm_to_vmem [thread:$0]  %s251, 128, %s253, %s241
        $region36: #{tpu_custom_call.1} parent=31 // pred_fallthru
          _
        // Predicated region
        $region37: #{tpu_custom_call.1} parent=31 // pred_check
          %p256 = pneg %p68
        $region38: #{tpu_custom_call.1} parent=31 // pred_check_branch
          %258 = sbr.rel (%p256) target = $region40
        $region39: #{tpu_custom_call.1} parent=31 // pred_region
          %s259 = sand.u32 %s22, 1
          %s260 = scalar_lea.sflag [#allocation6], %s259
          %s261 = sand.u32 %s58, 1
          %s262 = smul.addr %s261, 8
          %s263 = scalar_lea.vmem [#allocation5], %s262
          %265 = vsyncadd %s260, 0
          %s266 = smul.addr %s22, 8
          %s267 = scalar_lea.hbm %s1, %s266
          %s269 = sshll.u32 %s267, 4
          %s270 = int_to_ptr.hbm [resolvable:$true] %s269
          %s271 = sshll.u32 %s263, 4
          %s272 = int_to_ptr.vmem [resolvable:$true] %s271
          %274 = dma.hbm_to_vmem [thread:$0]  %s270, 128, %s272, %s260
        $region40: #{tpu_custom_call.1} parent=31 // pred_fallthru
          _
      $region32: #{tpu_custom_call.1} parent=5 // pred_fallthru
        _
      %p275 = scmp.le.s32.totalorder 1, %s22
      %p276 = scmp.lt.s32.totalorder %s22, 3
      %p277 = pnand %p275, %p276
      %p278 = pneg %p277
      // Predicated region
      $region41: #{tpu_custom_call.1} parent=5 // pred_check
        _
      $region42: #{tpu_custom_call.1} parent=5 // pred_check_branch
        %280 = sbr.rel (%p277) target = $region44
      $region43: #{tpu_custom_call.1} parent=5 // pred_region
        %s281 = ssub.s32 %s22, 1
        %s282 = sand.u32 %s35, 1
        %s283 = scalar_lea.sflag [#allocation3], %s282
        %s284 = sand.u32 %s35, 1
        %s285 = smul.addr %s284, 8
        %s286 = scalar_lea.vmem [#allocation2], %s285
        // Predicated region
        $region45: #{tpu_custom_call.1} parent=43 // pred_check
          %p287 = pneg %p48
        $region46: #{tpu_custom_call.1} parent=43 // pred_check_branch
          %289 = sbr.rel (%p287) target = $region48
        $region47: #{tpu_custom_call.1} parent=43 // pred_region
          %291 = dma.done %s283, 128
        $region48: #{tpu_custom_call.1} parent=43 // pred_fallthru
          _
        %s292 = sand.u32 %s27, 1
        %s293 = scalar_lea.sflag [#allocation6], %s292
        %s294 = sand.u32 %s61, 1
        %s295 = smul.addr %s294, 8
        %s296 = scalar_lea.vmem [#allocation5], %s295
        // Predicated region
        $region49: #{tpu_custom_call.1} parent=43 // pred_check
          %p297 = pneg %p74
        $region50: #{tpu_custom_call.1} parent=43 // pred_check_branch
          %299 = sbr.rel (%p297) target = $region52
        $region51: #{tpu_custom_call.1} parent=43 // pred_region
          %301 = dma.done %s293, 128
        $region52: #{tpu_custom_call.1} parent=43 // pred_fallthru
          _
        // Predicated region
        $region53: #{tpu_custom_call.1} parent=43 // pred_check
          %p302 = pneg %p95
        $region54: #{tpu_custom_call.1} parent=43 // pred_check_branch
          %304 = sbr.rel (%p302) target = $region56
        $region55: #{tpu_custom_call.1} parent=43 // pred_region
          %306 = dma.done [#allocation6], 2048
        $region56: #{tpu_custom_call.1} parent=43 // pred_fallthru
          _
        // Predicated region
        $region57: #{tpu_custom_call.1} parent=43 // pred_check
          %p307 = pneg %p137
        $region58: #{tpu_custom_call.1} parent=43 // pred_check_branch
          %309 = sbr.rel (%p307) target = $region60
        $region59: #{tpu_custom_call.1} parent=43 // pred_region
          %311 = dma.done [#allocation9], 256
        $region60: #{tpu_custom_call.1} parent=43 // pred_fallthru
          _
        %s312 = sand.u32 %s35, 1
        %s313 = scalar_lea.sflag [#allocation3], %s312
        %s314 = sand.u32 %s35, 1
        %s315 = smul.addr %s314, 8
        %s316 = scalar_lea.vmem [#allocation2], %s315
        %p317 = pneg %p48
        %p318 = pneg %p45
        %s319 = sand.u32 %s27, 1
        %s320 = scalar_lea.sflag [#allocation6], %s319
        %s321 = sand.u32 %s61, 1
        %s322 = smul.addr %s321, 8
        %s323 = scalar_lea.vmem [#allocation5], %s322
        %p324 = pneg %p74
        %p325 = pneg %p71
        %p326 = pneg %p95
        %p327 = pneg %p92
        %p328 = pneg %p116
        %p329 = pneg %p113
        %p330 = pneg %p137
        %p331 = pneg %p134
        %p332 = pneg %p158
        %p333 = pneg %p155
        %p334 = pneg %p184
        %p335 = pneg %p181
        %s336 = sand.u32 %s171, 1
        %s337 = scalar_lea.sflag [#allocation4], %s336
        %s338 = sand.u32 %s171, 1
        %s339 = smul.addr %s338, 8
        %s340 = scalar_lea.vmem [#allocation10], %s339
        %v342 = vld [vmem:[%s286] sm:$0xff]
        %v343 = vld [vmem:[%s296] sm:$0xff]
        %v344 = vld [vmem:[#allocation7] sm:$0xf]
        %v345 = vld [vmem:[#allocation7 + $0x8] sm:$0xf]
        %v346 = vld [vmem:[#allocation7 + $0x10] sm:$0xf]
        %v347 = vld [vmem:[#allocation7 + $0x18] sm:$0xf]
        %v348 = vld [vmem:[#allocation7 + $0x4] sm:$0xf]
        %v349 = vld [vmem:[#allocation7 + $0xc] sm:$0xf]
        %v350 = vld [vmem:[#allocation7 + $0x14] sm:$0xf]
        %v351 = vld [vmem:[#allocation7 + $0x1c] sm:$0xf]
        %v352 = vld [vmem:[#allocation7 + $0x24] sm:$0xf]
        %v353 = vld [vmem:[#allocation7 + $0x2c] sm:$0xf]
        %v354 = vld [vmem:[#allocation7 + $0x34] sm:$0xf]
        %v355 = vld [vmem:[#allocation7 + $0x3c] sm:$0xf]
        %v356 = vld [vmem:[%s3] sm:$0x1]
        %v357 = vpack.c.bf16 %v342, %v342
        %v362 = vunpack.c.l.b16 %v344
        %v363 = vunpack.c.l.b16 %v345
        %v364 = vunpack.c.l.b16 %v346
        %v365 = vunpack.c.l.b16 %v347
        %v366 = vpack.c.b16 %v363, %v362
        %v367 = vpack.c.b16 %v365, %v364
        %vm370 = vcmask 261120
        %v372 = vsel %vm370, %v357, 0
        %374 = vmatpush.bf16.msra.mxu0 0
        %375 = vmatpush.bf16.msra.mxu0 0
        %376 = vmatpush.bf16.msra.mxu0 0
        %377 = vmatpush.bf16.msra.mxu0 0
        %378 = vmatpush.bf16.msra.mxu0 0
        %379 = vmatpush.bf16.msra.mxu0 0
        %380 = vmatpush.bf16.msra.mxu0 %v367
        %381 = vmatpush.bf16.msra.mxu0 %v366
        %382 = vmatmul.bf16.gmra.mxu0 %v372
        %v383 = vpop.f32.mrf.mxu0
        %v384 = vadd.f32 0.0, %v383
        %v385 = vpop.f32.mrf.mxu0
        %386 = vdwg.mxu0
        %v387 = vpack.c.bf16 %v384, %v384
        %389 = vrot.lane.b32.xlu0 %v387, 96
        %v390 = vpop.permute.xlu0 %389
        %vm391 = vcmask 130048
        %v393 = vsel %vm391, %v387, 0
        %v396 = vsel %vm391, %v390, 0
        %398 = vmatpush.bf16.xpose.msra.mxu0 0
        %399 = vmatpush.bf16.xpose.msra.mxu0 0
        %400 = vmatpush.bf16.xpose.msra.mxu0 0
        %401 = vmatpush.bf16.xpose.msra.mxu0 0
        %402 = vmatpush.bf16.xpose.msra.mxu0 0
        %403 = vmatpush.bf16.xpose.msra.mxu0 0
        %404 = vmatpush.bf16.xpose.msra.mxu0 0
        %405 = vmatpush.bf16.xpose.msra.mxu0 %v396
        %406 = vmatmul.bf16.gmra.mxu0 %v393
        %v407 = vpop.f32.mrf.mxu0
        %v408 = vadd.f32 %v343, %v407
        %v409 = vpop.f32.mrf.mxu0
        %410 = vdwg.mxu0
        %vm411 = vcmask 64512
        %v412 = vsel %vm411, %v408, -inf
        %413 = vmax.xlane.f32.xlu0 %v412
        %v414 = vpop.xlane.xlu0 %413
        %v415 = vsub.f32 %v408, %v414
        %v416 = vmul.f32 %v415, 1.442695
        %v417 = vpow.pop %v416
        %v418 = vsel %vm411, %v417, 0.0
        %419 = vadd.xlane.f32.xlu0 %v418
        %v420 = vpop.xlane.xlu0 %419
        %v421 = vrcp.pop %v420
        %v422 = vmul.f32 %v417, %v421
        %v423 = vpack.c.bf16 %v422, %v422
        %424 = vrot.lane.b32.xlu0 %v387, 64
        %v425 = vpop.permute.xlu0 %424
        %v427 = vsel %vm411, %v423, 0
        %vm429 = vcmask 1043456
        %v431 = vsel %vm429, %v425, 0
        %433 = vmatpush.bf16.msra.mxu0 0
        %434 = vmatpush.bf16.msra.mxu0 0
        %435 = vmatpush.bf16.msra.mxu0 0
        %436 = vmatpush.bf16.msra.mxu0 0
        %437 = vmatpush.bf16.msra.mxu0 0
        %438 = vmatpush.bf16.msra.mxu0 0
        %439 = vmatpush.bf16.msra.mxu0 0
        %440 = vmatpush.bf16.msra.mxu0 %v431
        %441 = vmatmul.bf16.gmra.mxu0 %v427
        %v442 = vpop.f32.mrf.mxu0
        %v443 = vadd.f32 0.0, %v442
        %v444 = vpop.f32.mrf.mxu0
        %445 = vdwg.mxu0
        %v446 = vld [vmem:[#allocation7] sm:$0xf]
        %v447 = vld [vmem:[#allocation7 + $0x8] sm:$0xf]
        %v448 = vpack.c.bf16 %v443, %v443
        %449 = vrot.lane.b32.xlu0 %v387, 112
        %v450 = vpop.permute.xlu0 %449
        %451 = vrot.lane.b32.xlu0 %v387, 80
        %v452 = vpop.permute.xlu0 %451
        %v454 = vsel %vm391, %v450, 0
        %v457 = vsel %vm391, %v452, 0
        %459 = vmatpush.bf16.xpose.msra.mxu0 0
        %460 = vmatpush.bf16.xpose.msra.mxu0 0
        %461 = vmatpush.bf16.xpose.msra.mxu0 0
        %462 = vmatpush.bf16.xpose.msra.mxu0 0
        %463 = vmatpush.bf16.xpose.msra.mxu0 0
        %464 = vmatpush.bf16.xpose.msra.mxu0 0
        %465 = vmatpush.bf16.xpose.msra.mxu0 0
        %466 = vmatpush.bf16.xpose.msra.mxu0 %v457
        %467 = vmatmul.bf16.gmra.mxu0 %v454
        %v468 = vpop.f32.mrf.mxu0
        %v469 = vadd.f32 %v343, %v468
        %v470 = vpop.f32.mrf.mxu0
        %471 = vdwg.mxu0
        %v472 = vsel %vm411, %v469, -inf
        %473 = vmax.xlane.f32.xlu0 %v472
        %v474 = vpop.xlane.xlu0 %473
        %v475 = vsub.f32 %v469, %v474
        %v476 = vmul.f32 %v475, 1.442695
        %v477 = vpow.pop %v476
        %v478 = vsel %vm411, %v477, 0.0
        %479 = vadd.xlane.f32.xlu0 %v478
        %v480 = vpop.xlane.xlu0 %479
        %v481 = vrcp.pop %v480
        %v482 = vmul.f32 %v477, %v481
        %v483 = vpack.c.bf16 %v482, %v482
        %484 = vrot.lane.b32.xlu0 %v387, 48
        %v485 = vpop.permute.xlu0 %484
        %v487 = vsel %vm411, %v483, 0
        %v490 = vsel %vm429, %v485, 0
        %492 = vmatpush.bf16.msra.mxu0 0
        %493 = vmatpush.bf16.msra.mxu0 0
        %494 = vmatpush.bf16.msra.mxu0 0
        %495 = vmatpush.bf16.msra.mxu0 0
        %496 = vmatpush.bf16.msra.mxu0 0
        %497 = vmatpush.bf16.msra.mxu0 0
        %498 = vmatpush.bf16.msra.mxu0 0
        %499 = vmatpush.bf16.msra.mxu0 %v490
        %500 = vmatmul.bf16.gmra.mxu0 %v487
        %v501 = vpop.f32.mrf.mxu0
        %v502 = vadd.f32 0.0, %v501
        %v503 = vpop.f32.mrf.mxu0
        %504 = vdwg.mxu0
        %v505 = vpack.c.bf16 %v502, %v502
        %506 = vrot.lane.b32.xlu0 %v367, 32
        %v507 = vpop.permute.xlu0 %506
        %v510 = vsel %vm391, %v505, 0
        %512 = vmatpush.bf16.msra.mxu0 0
        %513 = vmatpush.bf16.msra.mxu0 0
        %514 = vmatpush.bf16.msra.mxu0 0
        %515 = vmatpush.bf16.msra.mxu0 0
        %516 = vmatpush.bf16.msra.mxu0 0
        %517 = vmatpush.bf16.msra.mxu0 0
        %518 = vmatpush.bf16.msra.mxu0 0
        %519 = vmatpush.bf16.msra.mxu0 %v507
        %520 = vmatmul.bf16.gmra.mxu0 %v510
        %v521 = vpop.f32.mrf.mxu0
        %v522 = vadd.f32 0.0, %v521
        %v523 = vpop.f32.mrf.mxu0
        %524 = vdwg.mxu0
        %v527 = vunpack.c.l.b16 %v446
        %v528 = vunpack.c.l.b16 %v447
        %v529 = vpack.c.b16 %v528, %v527
        %530 = vrot.lane.b32.xlu0 %v529, 32
        %v531 = vpop.permute.xlu0 %530
        %v534 = vsel %vm391, %v448, 0
        %536 = vmatpush.bf16.msra.mxu0 0
        %537 = vmatpush.bf16.msra.mxu0 0
        %538 = vmatpush.bf16.msra.mxu0 0
        %539 = vmatpush.bf16.msra.mxu0 0
        %540 = vmatpush.bf16.msra.mxu0 0
        %541 = vmatpush.bf16.msra.mxu0 0
        %542 = vmatpush.bf16.msra.mxu0 0
        %543 = vmatpush.bf16.msra.mxu0 %v531
        %544 = vmatmul.bf16.gmra.mxu0 %v534
        %v545 = vpop.f32.mrf.mxu0
        %v546 = vadd.f32 %v522, %v545
        %v547 = vpop.f32.mrf.mxu0
        %548 = vdwg.mxu0
        %v549 = vadd.f32 %v342, %v546
        %v550 = vsel %vm370, %v549, 0.0
        %551 = vadd.xlane.f32.xlu0 %v550
        %v552 = vpop.xlane.xlu0 %551
        %v553 = vrcp.pop 32.0
        %v554 = vmul.f32 32.0, %v553
        %v555 = vsub.f32 1.0, %v554
        %v556 = vmul.f32 %v553, %v555
        %v557 = vadd.f32 %v553, %v556
        %vm558 = vweird.f32 %v553
        %v559 = vsel %vm558, %v553, %v557
        %v560 = vmul.f32 %v552, %v559
        %v561 = vsub.f32 %v549, %v560
        %v562 = vmul.f32 %v561, %v561
        %v563 = vsel %vm370, %v562, 0.0
        %564 = vadd.xlane.f32.xlu0 %v563
        %v565 = vpop.xlane.xlu0 %564
        %v566 = vmul.f32 %v565, %v559
        %v567 = vadd.f32 %v566, 1e-05
        %v568 = vrsqrt.pop %v567
        %v569 = vmul.f32 %v568, %v567
        %v570 = vmul.f32 %v569, %v568
        %v571 = vmul.f32 0.5, %v570
        %v572 = vsub.f32 1.5, %v571
        %v573 = vmul.f32 %v568, %v572
        %vm574 = vweird.f32 %v567
        %vm575 = vweird.f32 %v568
        %vm576 = vmor %vm574, %vm575
        %v577 = vsel %vm576, %v568, %v573
        %v578 = vmul.f32 %v561, %v577
        %v579 = vpack.c.bf16 %v578, %v578
        %v581 = vperm.slane %v356, 0
        %v587 = vunpack.c.l.b16 %v348
        %v588 = vunpack.c.l.b16 %v349
        %v589 = vunpack.c.l.b16 %v350
        %v590 = vunpack.c.l.b16 %v351
        %v591 = vpack.c.b16 %v588, %v587
        %v592 = vpack.c.b16 %v590, %v589
        %v596 = vsel %vm370, %v579, 0
        %598 = vmatpush.bf16.msra.mxu0 0
        %599 = vmatpush.bf16.msra.mxu0 0
        %600 = vmatpush.bf16.msra.mxu0 0
        %601 = vmatpush.bf16.msra.mxu0 0
        %602 = vmatpush.bf16.msra.mxu0 0
        %603 = vmatpush.bf16.msra.mxu0 0
        %604 = vmatpush.bf16.msra.mxu0 %v592
        %605 = vmatpush.bf16.msra.mxu0 %v591
        %606 = vmatmul.bf16.gmra.mxu0 %v596
        %v607 = vpop.f32.mrf.mxu0
        %v608 = vadd.f32 %v581, %v607
        %v609 = vpop.f32.mrf.mxu0
        %610 = vdwg.mxu0
        %v611 = vmax.f32 %v608, 0.0
        %v612 = vpack.c.bf16 %v611, %v611
        %v617 = vunpack.c.l.b16 %v352
        %v618 = vunpack.c.l.b16 %v353
        %v619 = vunpack.c.l.b16 %v354
        %v620 = vunpack.c.l.b16 %v355
        %v621 = vpack.c.b16 %v618, %v617
        %v622 = vpack.c.b16 %v620, %v619
        %623 = vrot.lane.b32.xlu0 %v591, 64
        %v624 = vpop.permute.xlu0 %623
        %625 = vrot.lane.b32.xlu0 %v592, 64
        %v626 = vpop.permute.xlu0 %625
        %627 = vrot.lane.b32.xlu0 %v621, 64
        %v628 = vpop.permute.xlu0 %627
        %629 = vrot.lane.b32.xlu0 %v622, 64
        %v630 = vpop.permute.xlu0 %629
        %635 = vrot.lane.b32.xlu0 %v581, 64
        %v636 = vpop.permute.xlu0 %635
        %vm638 = vcmask 523264
        %v640 = vsel %vm638, %v612, 0
        %642 = vmatpush.bf16.msra.mxu0 0
        %643 = vmatpush.bf16.msra.mxu0 0
        %644 = vmatpush.bf16.msra.mxu0 0
        %645 = vmatpush.bf16.msra.mxu0 0
        %646 = vmatpush.bf16.msra.mxu0 %v630
        %647 = vmatpush.bf16.msra.mxu0 %v628
        %648 = vmatpush.bf16.msra.mxu0 %v626
        %649 = vmatpush.bf16.msra.mxu0 %v624
        %650 = vmatmul.bf16.gmra.mxu0 %v640
        %v651 = vpop.f32.mrf.mxu0
        %v652 = vadd.f32 %v636, %v651
        %v653 = vpop.f32.mrf.mxu0
        %654 = vdwg.mxu0
        %v655 = vadd.f32 %v578, %v652
        %v656 = vsel %vm370, %v655, 0.0
        %657 = vadd.xlane.f32.xlu0 %v656
        %v658 = vpop.xlane.xlu0 %657
        %v659 = vmul.f32 %v658, %v559
        %v660 = vsub.f32 %v655, %v659
        %v661 = vmul.f32 %v660, %v660
        %v662 = vsel %vm370, %v661, 0.0
        %663 = vadd.xlane.f32.xlu0 %v662
        %v664 = vpop.xlane.xlu0 %663
        %v665 = vmul.f32 %v664, %v559
        %v666 = vadd.f32 %v665, 1e-05
        %v667 = vrsqrt.pop %v666
        %v668 = vmul.f32 %v667, %v666
        %v669 = vmul.f32 %v668, %v667
        %v670 = vmul.f32 0.5, %v669
        %v671 = vsub.f32 1.5, %v670
        %v672 = vmul.f32 %v667, %v671
        %vm673 = vweird.f32 %v666
        %vm674 = vweird.f32 %v667
        %vm675 = vmor %vm673, %vm674
        %v676 = vsel %vm675, %v667, %v672
        %v677 = vmul.f32 %v660, %v676
        %s678 = scalar_lea.vmem [#allocation7], 64
        %v679 = vld [vmem:[%s678] sm:$0xf]
        %v680 = vld [vmem:[%s678 + $0x8] sm:$0xf]
        %v681 = vld [vmem:[%s678 + $0x10] sm:$0xf]
        %v682 = vld [vmem:[%s678 + $0x18] sm:$0xf]
        %v683 = vld [vmem:[%s678 + $0x4] sm:$0xf]
        %v684 = vld [vmem:[%s678 + $0xc] sm:$0xf]
        %v685 = vld [vmem:[%s678 + $0x14] sm:$0xf]
        %v686 = vld [vmem:[%s678 + $0x1c] sm:$0xf]
        %v687 = vld [vmem:[%s678 + $0x24] sm:$0xf]
        %v688 = vld [vmem:[%s678 + $0x2c] sm:$0xf]
        %v689 = vld [vmem:[%s678 + $0x34] sm:$0xf]
        %v690 = vld [vmem:[%s678 + $0x3c] sm:$0xf]
        %s691 = scalar_lea.vmem %s3, 1
        %v692 = vld [vmem:[%s691] sm:$0x1]
        %v693 = vpack.c.bf16 %v677, %v677
        %v698 = vunpack.c.l.b16 %v679
        %v699 = vunpack.c.l.b16 %v680
        %v700 = vunpack.c.l.b16 %v681
        %v701 = vunpack.c.l.b16 %v682
        %v702 = vpack.c.b16 %v699, %v698
        %v703 = vpack.c.b16 %v701, %v700
        %v707 = vsel %vm370, %v693, 0
        %709 = vmatpush.bf16.msra.mxu0 0
        %710 = vmatpush.bf16.msra.mxu0 0
        %711 = vmatpush.bf16.msra.mxu0 0
        %712 = vmatpush.bf16.msra.mxu0 0
        %713 = vmatpush.bf16.msra.mxu0 0
        %714 = vmatpush.bf16.msra.mxu0 0
        %715 = vmatpush.bf16.msra.mxu0 %v703
        %716 = vmatpush.bf16.msra.mxu0 %v702
        %717 = vmatmul.bf16.gmra.mxu0 %v707
        %v718 = vpop.f32.mrf.mxu0
        %v719 = vadd.f32 0.0, %v718
        %v720 = vpop.f32.mrf.mxu0
        %721 = vdwg.mxu0
        %v722 = vpack.c.bf16 %v719, %v719
        %724 = vrot.lane.b32.xlu0 %v722, 96
        %v725 = vpop.permute.xlu0 %724
        %v727 = vsel %vm391, %v722, 0
        %v730 = vsel %vm391, %v725, 0
        %732 = vmatpush.bf16.xpose.msra.mxu0 0
        %733 = vmatpush.bf16.xpose.msra.mxu0 0
        %734 = vmatpush.bf16.xpose.msra.mxu0 0
        %735 = vmatpush.bf16.xpose.msra.mxu0 0
        %736 = vmatpush.bf16.xpose.msra.mxu0 0
        %737 = vmatpush.bf16.xpose.msra.mxu0 0
        %738 = vmatpush.bf16.xpose.msra.mxu0 0
        %739 = vmatpush.bf16.xpose.msra.mxu0 %v730
        %740 = vmatmul.bf16.gmra.mxu0 %v727
        %v741 = vpop.f32.mrf.mxu0
        %v742 = vadd.f32 %v343, %v741
        %v743 = vpop.f32.mrf.mxu0
        %744 = vdwg.mxu0
        %v745 = vsel %vm411, %v742, -inf
        %746 = vmax.xlane.f32.xlu0 %v745
        %v747 = vpop.xlane.xlu0 %746
        %v748 = vsub.f32 %v742, %v747
        %v749 = vmul.f32 %v748, 1.442695
        %v750 = vpow.pop %v749
        %v751 = vsel %vm411, %v750, 0.0
        %752 = vadd.xlane.f32.xlu0 %v751
        %v753 = vpop.xlane.xlu0 %752
        %v754 = vrcp.pop %v753
        %v755 = vmul.f32 %v750, %v754
        %v756 = vpack.c.bf16 %v755, %v755
        %757 = vrot.lane.b32.xlu0 %v722, 64
        %v758 = vpop.permute.xlu0 %757
        %v760 = vsel %vm411, %v756, 0
        %v763 = vsel %vm429, %v758, 0
        %765 = vmatpush.bf16.msra.mxu0 0
        %766 = vmatpush.bf16.msra.mxu0 0
        %767 = vmatpush.bf16.msra.mxu0 0
        %768 = vmatpush.bf16.msra.mxu0 0
        %769 = vmatpush.bf16.msra.mxu0 0
        %770 = vmatpush.bf16.msra.mxu0 0
        %771 = vmatpush.bf16.msra.mxu0 0
        %772 = vmatpush.bf16.msra.mxu0 %v763
        %773 = vmatmul.bf16.gmra.mxu0 %v760
        %v774 = vpop.f32.mrf.mxu0
        %v775 = vadd.f32 0.0, %v774
        %v776 = vpop.f32.mrf.mxu0
        %777 = vdwg.mxu0
        %v778 = vld [vmem:[%s678] sm:$0xf]
        %v779 = vld [vmem:[%s678 + $0x8] sm:$0xf]
        %v780 = vpack.c.bf16 %v775, %v775
        %781 = vrot.lane.b32.xlu0 %v722, 112
        %v782 = vpop.permute.xlu0 %781
        %783 = vrot.lane.b32.xlu0 %v722, 80
        %v784 = vpop.permute.xlu0 %783
        %v786 = vsel %vm391, %v782, 0
        %v789 = vsel %vm391, %v784, 0
        %791 = vmatpush.bf16.xpose.msra.mxu0 0
        %792 = vmatpush.bf16.xpose.msra.mxu0 0
        %793 = vmatpush.bf16.xpose.msra.mxu0 0
        %794 = vmatpush.bf16.xpose.msra.mxu0 0
        %795 = vmatpush.bf16.xpose.msra.mxu0 0
        %796 = vmatpush.bf16.xpose.msra.mxu0 0
        %797 = vmatpush.bf16.xpose.msra.mxu0 0
        %798 = vmatpush.bf16.xpose.msra.mxu0 %v789
        %799 = vmatmul.bf16.gmra.mxu0 %v786
        %v800 = vpop.f32.mrf.mxu0
        %v801 = vadd.f32 %v343, %v800
        %v802 = vpop.f32.mrf.mxu0
        %803 = vdwg.mxu0
        %v804 = vsel %vm411, %v801, -inf
        %805 = vmax.xlane.f32.xlu0 %v804
        %v806 = vpop.xlane.xlu0 %805
        %v807 = vsub.f32 %v801, %v806
        %v808 = vmul.f32 %v807, 1.442695
        %v809 = vpow.pop %v808
        %v810 = vsel %vm411, %v809, 0.0
        %811 = vadd.xlane.f32.xlu0 %v810
        %v812 = vpop.xlane.xlu0 %811
        %v813 = vrcp.pop %v812
        %v814 = vmul.f32 %v809, %v813
        %v815 = vpack.c.bf16 %v814, %v814
        %816 = vrot.lane.b32.xlu0 %v722, 48
        %v817 = vpop.permute.xlu0 %816
        %v819 = vsel %vm411, %v815, 0
        %v822 = vsel %vm429, %v817, 0
        %824 = vmatpush.bf16.msra.mxu0 0
        %825 = vmatpush.bf16.msra.mxu0 0
        %826 = vmatpush.bf16.msra.mxu0 0
        %827 = vmatpush.bf16.msra.mxu0 0
        %828 = vmatpush.bf16.msra.mxu0 0
        %829 = vmatpush.bf16.msra.mxu0 0
        %830 = vmatpush.bf16.msra.mxu0 0
        %831 = vmatpush.bf16.msra.mxu0 %v822
        %832 = vmatmul.bf16.gmra.mxu0 %v819
        %v833 = vpop.f32.mrf.mxu0
        %v834 = vadd.f32 0.0, %v833
        %v835 = vpop.f32.mrf.mxu0
        %836 = vdwg.mxu0
        %v837 = vpack.c.bf16 %v834, %v834
        %838 = vrot.lane.b32.xlu0 %v703, 32
        %v839 = vpop.permute.xlu0 %838
        %v842 = vsel %vm391, %v837, 0
        %844 = vmatpush.bf16.msra.mxu0 0
        %845 = vmatpush.bf16.msra.mxu0 0
        %846 = vmatpush.bf16.msra.mxu0 0
        %847 = vmatpush.bf16.msra.mxu0 0
        %848 = vmatpush.bf16.msra.mxu0 0
        %849 = vmatpush.bf16.msra.mxu0 0
        %850 = vmatpush.bf16.msra.mxu0 0
        %851 = vmatpush.bf16.msra.mxu0 %v839
        %852 = vmatmul.bf16.gmra.mxu0 %v842
        %v853 = vpop.f32.mrf.mxu0
        %v854 = vadd.f32 0.0, %v853
        %v855 = vpop.f32.mrf.mxu0
        %856 = vdwg.mxu0
        %v859 = vunpack.c.l.b16 %v778
        %v860 = vunpack.c.l.b16 %v779
        %v861 = vpack.c.b16 %v860, %v859
        %862 = vrot.lane.b32.xlu0 %v861, 32
        %v863 = vpop.permute.xlu0 %862
        %v866 = vsel %vm391, %v780, 0
        %868 = vmatpush.bf16.msra.mxu0 0
        %869 = vmatpush.bf16.msra.mxu0 0
        %870 = vmatpush.bf16.msra.mxu0 0
        %871 = vmatpush.bf16.msra.mxu0 0
        %872 = vmatpush.bf16.msra.mxu0 0
        %873 = vmatpush.bf16.msra.mxu0 0
        %874 = vmatpush.bf16.msra.mxu0 0
        %875 = vmatpush.bf16.msra.mxu0 %v863
        %876 = vmatmul.bf16.gmra.mxu0 %v866
        %v877 = vpop.f32.mrf.mxu0
        %v878 = vadd.f32 %v854, %v877
        %v879 = vpop.f32.mrf.mxu0
        %880 = vdwg.mxu0
        %v881 = vadd.f32 %v677, %v878
        %v882 = vsel %vm370, %v881, 0.0
        %883 = vadd.xlane.f32.xlu0 %v882
        %v884 = vpop.xlane.xlu0 %883
        %v885 = vmul.f32 %v884, %v559
        %v886 = vsub.f32 %v881, %v885
        %v887 = vmul.f32 %v886, %v886
        %v888 = vsel %vm370, %v887, 0.0
        %889 = vadd.xlane.f32.xlu0 %v888
        %v890 = vpop.xlane.xlu0 %889
        %v891 = vmul.f32 %v890, %v559
        %v892 = vadd.f32 %v891, 1e-05
        %v893 = vrsqrt.pop %v892
        %v894 = vmul.f32 %v893, %v892
        %v895 = vmul.f32 %v894, %v893
        %v896 = vmul.f32 0.5, %v895
        %v897 = vsub.f32 1.5, %v896
        %v898 = vmul.f32 %v893, %v897
        %vm899 = vweird.f32 %v892
        %vm900 = vweird.f32 %v893
        %vm901 = vmor %vm899, %vm900
        %v902 = vsel %vm901, %v893, %v898
        %v903 = vmul.f32 %v886, %v902
        %v904 = vpack.c.bf16 %v903, %v903
        %v906 = vperm.slane %v692, 0
        %v912 = vunpack.c.l.b16 %v683
        %v913 = vunpack.c.l.b16 %v684
        %v914 = vunpack.c.l.b16 %v685
        %v915 = vunpack.c.l.b16 %v686
        %v916 = vpack.c.b16 %v913, %v912
        %v917 = vpack.c.b16 %v915, %v914
        %v921 = vsel %vm370, %v904, 0
        %923 = vmatpush.bf16.msra.mxu0 0
        %924 = vmatpush.bf16.msra.mxu0 0
        %925 = vmatpush.bf16.msra.mxu0 0
        %926 = vmatpush.bf16.msra.mxu0 0
        %927 = vmatpush.bf16.msra.mxu0 0
        %928 = vmatpush.bf16.msra.mxu0 0
        %929 = vmatpush.bf16.msra.mxu0 %v917
        %930 = vmatpush.bf16.msra.mxu0 %v916
        %931 = vmatmul.bf16.gmra.mxu0 %v921
        %v932 = vpop.f32.mrf.mxu0
        %v933 = vadd.f32 %v906, %v932
        %v934 = vpop.f32.mrf.mxu0
        %935 = vdwg.mxu0
        %v936 = vmax.f32 %v933, 0.0
        %v937 = vpack.c.bf16 %v936, %v936
        %v942 = vunpack.c.l.b16 %v687
        %v943 = vunpack.c.l.b16 %v688
        %v944 = vunpack.c.l.b16 %v689
        %v945 = vunpack.c.l.b16 %v690
        %v946 = vpack.c.b16 %v943, %v942
        %v947 = vpack.c.b16 %v945, %v944
        %948 = vrot.lane.b32.xlu0 %v916, 64
        %v949 = vpop.permute.xlu0 %948
        %950 = vrot.lane.b32.xlu0 %v917, 64
        %v951 = vpop.permute.xlu0 %950
        %952 = vrot.lane.b32.xlu0 %v946, 64
        %v953 = vpop.permute.xlu0 %952
        %954 = vrot.lane.b32.xlu0 %v947, 64
        %v955 = vpop.permute.xlu0 %954
        %960 = vrot.lane.b32.xlu0 %v906, 64
        %v961 = vpop.permute.xlu0 %960
        %v964 = vsel %vm638, %v937, 0
        %966 = vmatpush.bf16.msra.mxu0 0
        %967 = vmatpush.bf16.msra.mxu0 0
        %968 = vmatpush.bf16.msra.mxu0 0
        %969 = vmatpush.bf16.msra.mxu0 0
        %970 = vmatpush.bf16.msra.mxu0 %v955
        %971 = vmatpush.bf16.msra.mxu0 %v953
        %972 = vmatpush.bf16.msra.mxu0 %v951
        %973 = vmatpush.bf16.msra.mxu0 %v949
        %974 = vmatmul.bf16.gmra.mxu0 %v964
        %v975 = vpop.f32.mrf.mxu0
        %v976 = vadd.f32 %v961, %v975
        %v977 = vpop.f32.mrf.mxu0
        %978 = vdwg.mxu0
        %v979 = vadd.f32 %v903, %v976
        %v980 = vsel %vm370, %v979, 0.0
        %981 = vadd.xlane.f32.xlu0 %v980
        %v982 = vpop.xlane.xlu0 %981
        %v983 = vmul.f32 %v982, %v559
        %v984 = vsub.f32 %v979, %v983
        %v985 = vmul.f32 %v984, %v984
        %v986 = vsel %vm370, %v985, 0.0
        %987 = vadd.xlane.f32.xlu0 %v986
        %v988 = vpop.xlane.xlu0 %987
        %v989 = vmul.f32 %v988, %v559
        %v990 = vadd.f32 %v989, 1e-05
        %v991 = vrsqrt.pop %v990
        %v992 = vmul.f32 %v991, %v990
        %v993 = vmul.f32 %v992, %v991
        %v994 = vmul.f32 0.5, %v993
        %v995 = vsub.f32 1.5, %v994
        %v996 = vmul.f32 %v991, %v995
        %vm997 = vweird.f32 %v990
        %vm998 = vweird.f32 %v991
        %vm999 = vmor %vm997, %vm998
        %v1000 = vsel %vm999, %v991, %v996
        %v1001 = vmul.f32 %v984, %v1000
        %v1002 = vpack.c.bf16 %v1001, %v1001
        %v1003 = vld [vmem:[#allocation8] sm:$0xf]
        %v1004 = vld [vmem:[#allocation8 + $0x4] sm:$0xf]
        %v1005 = vld [vmem:[#allocation8 + $0x8] sm:$0xf]
        %v1006 = vld [vmem:[#allocation8 + $0xc] sm:$0xf]
        %v1007 = vld [vmem:[%s5] sm:$0x1]
        %v1009 = vperm.slane %v1007, 0
        %v1015 = vunpack.c.l.b16 %v1003
        %v1016 = vunpack.c.l.b16 %v1004
        %v1017 = vunpack.c.l.b16 %v1005
        %v1018 = vunpack.c.l.b16 %v1006
        %v1019 = vpack.c.b16 %v1016, %v1015
        %v1020 = vpack.c.b16 %v1018, %v1017
        %v1024 = vsel %vm370, %v1002, 0
        %1026 = vmatpush.bf16.msra.mxu0 0
        %1027 = vmatpush.bf16.msra.mxu0 0
        %1028 = vmatpush.bf16.msra.mxu0 0
        %1029 = vmatpush.bf16.msra.mxu0 0
        %1030 = vmatpush.bf16.msra.mxu0 0
        %1031 = vmatpush.bf16.msra.mxu0 0
        %1032 = vmatpush.bf16.msra.mxu0 %v1020
        %1033 = vmatpush.bf16.msra.mxu0 %v1019
        %1034 = vmatmul.bf16.gmra.mxu0 %v1024
        %v1035 = vpop.f32.mrf.mxu0
        %v1036 = vadd.f32 %v1009, %v1035
        %v1037 = vpop.f32.mrf.mxu0
        %1038 = vdwg.mxu0
        %1039 = vst [vmem:[%s340] sm:$0xff] %v1036
        %s1040 = sand.u32 %s171, 1
        %s1041 = scalar_lea.sflag [#allocation4], %s1040
        %s1042 = sand.u32 %s171, 1
        %s1043 = smul.addr %s1042, 8
        %s1044 = scalar_lea.vmem [#allocation10], %s1043
        // Predicated region
        $region61: #{tpu_custom_call.1} parent=43 // pred_check
          %p1045 = pneg %p181
        $region62: #{tpu_custom_call.1} parent=43 // pred_check_branch
          %1047 = sbr.rel (%p1045) target = $region64
        $region63: #{tpu_custom_call.1} parent=43 // pred_region
          %1049 = vsyncadd %s1041, 0
          %s1050 = smul.addr %s27, 8
          %s1051 = scalar_lea.hbm %s6, %s1050
          %s1053 = sshll.u32 %s1044, 4
          %s1054 = int_to_ptr.vmem [resolvable:$true] %s1053
          %s1055 = sshll.u32 %s1051, 4
          %s1056 = int_to_ptr.hbm [resolvable:$true] %s1055
          %1058 = dma.vmem_to_hbm [thread:$0]  %s1054, 128, %s1056, %s1041
        $region64: #{tpu_custom_call.1} parent=43 // pred_fallthru
          _
      $region44: #{tpu_custom_call.1} parent=5 // pred_fallthru
        _
      %p1059 = scmp.le.s32.totalorder 2, %s22
      // Predicated region
      $region65: #{tpu_custom_call.1} parent=5 // pred_check
        %p1060 = pneg %p1059
      $region66: #{tpu_custom_call.1} parent=5 // pred_check_branch
        %1062 = sbr.rel (%p1060) target = $region68
      $region67: #{tpu_custom_call.1} parent=5 // pred_region
        %s1063 = ssub.s32 %s22, 2
        // Predicated region
        $region69: #{tpu_custom_call.1} parent=67 // pred_check
          %p1064 = pneg %p187
        $region70: #{tpu_custom_call.1} parent=67 // pred_check_branch
          %1066 = sbr.rel (%p1064) target = $region72
        $region71: #{tpu_custom_call.1} parent=67 // pred_region
          %s1067 = sand.u32 %s172, 1
          %s1068 = scalar_lea.sflag [#allocation4], %s1067
          %s1069 = sand.u32 %s172, 1
          %s1070 = smul.addr %s1069, 8
          %s1071 = scalar_lea.vmem [#allocation10], %s1070
          %1073 = dma.done %s1068, 128
        $region72: #{tpu_custom_call.1} parent=67 // pred_fallthru
          _
      $region68: #{tpu_custom_call.1} parent=5 // pred_fallthru
        _
    $region6: #{tpu_custom_call.1} parent=1 // loop_footer
      %s26 = sadd.s32 1, %s22
    $region7: #{tpu_custom_call.1} parent=1 // loop_footer_branch
      %21 = sbr.rel target = $region3
    $region8: #{tpu_custom_call.1} parent=1 // loop_exit
      _
    %1074 = vsyncpa [#allocation3], 1
    %s1075 = scalar_lea.sflag [#allocation3], 1
    %1076 = vsyncpa %s1075, 1
    %1077 = vsyncpa [#allocation6], 1
    %s1078 = scalar_lea.sflag [#allocation6], 1
    %1079 = vsyncpa %s1078, 1
    %1080 = vsyncpa [#allocation9], 1
    %1081 = vsyncpa [#allocation4], 1
    %s1082 = scalar_lea.sflag [#allocation4], 1
    %1083 = vsyncpa %s1082, 1

</llo_original>
